<compile_context>
chip_gen: v6e
topology: v6e:2x2x1
jax: 0.10.0
libtpu: 0.0.40
codegen_flags: <defaults>
</compile_context>

<pallas_src>
import functools
import math

import numpy as np
import jax
import jax.numpy as jnp
from jax.experimental import pallas as pl
from jax.experimental.pallas import tpu as pltpu


def _raymarch_kernel(dens_ref, len_ref, dirs_ref, feat_ref,
                     shiftm_ref, trim_ref, dnormm_ref, expw_ref, redf_ref,
                     redr_ref, expo_ref, lastm_ref, initm_ref, bg_ref,
                     w_ref, f_ref, d_ref, o_ref, *,
                     background_opacity, density_relu,
                     background_density_bias, blend_output,
                     capping_function, weight_function):
    f32 = jnp.float32

    dens = dens_ref[...].astype(f32)       # (TR, L)   rays_densities[..., 0]
    zl = len_ref[...].astype(f32)          # (TR, L)   ray_lengths
    dirs = dirs_ref[...].astype(f32)       # (TR, 3R)  ray_directions (packed)
    feats = feat_ref[...].astype(f32)      # (TR, L*F) rays_features (packed)
    lastm = lastm_ref[...]                 # (1, L)    1.0 where point == P-1
    initm = initm_ref[...]                 # (1, L)    1.0 where point < st
    bg = bg_ref[...]                       # (1, R*F)  bg color per packed ray

    # NOTE (perf-review item 8): all 0/1 shift/prefix/placement matmuls below
    # use Mosaic's default f32 matmul path, which is the multi-pass near-exact
    # one (empirically exact to <<1e-4 vs. the pure-JAX reference), so the
    # cancellation in `zl_next - zl` and the cumulative absorption are safe
    # without an explicit precision pin.

    # deltas[p] = z[p+1] - z[p] (p < P-1), background_opacity at p = P-1,
    # then scaled by ||ray_direction|| computed in-kernel.
    zl_next = jnp.dot(zl, shiftm_ref[...], preferred_element_type=f32)
    dnorm = jnp.sqrt(jnp.dot(dirs * dirs, dnormm_ref[...],
                             preferred_element_type=f32))            # (TR, L)
    deltas = ((zl_next - zl) * (1.0 - lastm)
              + background_opacity * lastm) * dnorm

    d = dens
    # TODO(synk): density_noise_std > 0 (torch.randn_like noise) is not
    # implemented in-kernel; the wrapper rejects non-default values.
    if density_relu:
        d = jnp.maximum(d, 0.0) + background_density_bias
    wd = deltas * d

    def cap(x):
        if capping_function == "exponential":
            return 1.0 - jnp.exp(-x)
        return jnp.minimum(x, 1.0)         # 'cap1'

    capped = cap(wd)

    # absorption_shifted[p] = 1 - cap(cumsum(wd)[p - st]) for p >= st, else 1.
    # The roll is folded into the (block-diagonal, per-ray) prefix-sum matrix.
    cum_shift = jnp.dot(wd, trim_ref[...], preferred_element_type=f32)
    absorb = initm + (1.0 - initm) * (1.0 - cap(cum_shift))

    if weight_function == "product":
        weights = capped * absorb
    else:                                  # 'minimum'
        weights = jnp.minimum(capped, absorb)
    w_ref[...] = weights.astype(w_ref.dtype)

    # per-ray reductions: opacities = cap(total sum of wd); depth = sum w*z.
    redr = redr_ref[...]                                              # (L, R)
    opac = cap(jnp.dot(wd, redr, preferred_element_type=f32))         # (TR, R)
    o_ref[...] = opac.astype(o_ref.dtype)
    d_ref[...] = jnp.dot(weights * zl, redr,
                         preferred_element_type=f32).astype(d_ref.dtype)

    # Weighted feature reduction entirely in the packed lane layout on the MXU:
    #   w_exp[n, r*P*F + p*F + f] = weights[n, r*P + p]
    #   featsum[n, r*F + f]       = sum_p weights[n, r*P+p] * feats[n, r*P*F+p*F+f]
    w_exp = jnp.dot(weights, expw_ref[...], preferred_element_type=f32)
    featsum = jnp.dot(w_exp * feats, redf_ref[...],
                      preferred_element_type=f32)                     # (TR, R*F)

    # TODO(synk): hard_background=True (replace last sample's features with
    # bg_color before the weighted sum) is not implemented; wrapper rejects it.
    opac_f = jnp.dot(opac, expo_ref[...], preferred_element_type=f32)  # (TR, R*F)
    alpha = opac_f if blend_output else 1.0
    f_ref[...] = (alpha * featsum + (1.0 - opac_f) * bg).astype(f_ref.dtype)


@functools.lru_cache(maxsize=None)
def _const_mats(P, F, rpack, st):
    """0/1 placement / prefix matrices + masks for `rpack` lane-packed rays."""
    L = rpack * P
    j = np.arange(L)[:, None]
    k = np.arange(L)[None, :]
    same_ray = (j // P) == (k // P)
    # next-sample shift: out[k] = x[k+1] within the same ray (0 at ray end)
    shiftm = (same_ray & (j == k + 1)).astype(np.float32)             # (L, L)
    # shifted prefix sum: out[k] = sum_{p_j <= p_k - st, same ray} x[j]
    trim = (same_ray & ((j % P) + st <= (k % P))).astype(np.float32)  # (L, L)
    # sum 3 direction components per ray, broadcast to all P points of the ray
    jd = np.arange(3 * rpack)[:, None]
    dnormm = ((jd // 3) == (np.arange(L)[None, :] // P)).astype(np.float32)
    # expand weights (per point) to the per-(point, feature) lane layout
    kk = np.arange(L)[:, None]
    m = np.arange(L * F)[None, :]
    expw = (((kk // P) == (m // (P * F)))
            & ((kk % P) == ((m % (P * F)) // F))).astype(np.float32)  # (L, L*F)
    # reduce the (point, feature) lanes down to per-(ray, feature)
    mm = np.arange(L * F)[:, None]
    c = np.arange(rpack * F)[None, :]
    redf = (((mm // (P * F)) == (c // F))
            & ((mm % F) == (c % F))).astype(np.float32)               # (L*F, R*F)
    # reduce per-point lanes to one value per ray
    redr = ((np.arange(L)[:, None] // P)
            == np.arange(rpack)[None, :]).astype(np.float32)          # (L, R)
    # broadcast one value per ray to the per-(ray, feature) lanes
    expo = (np.arange(rpack)[:, None]
            == (np.arange(rpack * F)[None, :] // F)).astype(np.float32)
    # lane masks: last point of each ray / first `st` points of each ray
    p_of_lane = np.arange(L) % P
    lastm = (p_of_lane == P - 1).astype(np.float32)[None, :]          # (1, L)
    initm = (p_of_lane < st).astype(np.float32)[None, :]              # (1, L)
    return shiftm, trim, dnormm, expw, redf, redr, expo, lastm, initm


def emission_absorption_raymarcher(
        rays_densities, rays_features, aux, ray_lengths, ray_directions,
        density_noise_std=0.0, bg_color=None, *,
        surface_thickness=1, background_opacity=1e10, density_relu=True,
        blend_output=True, background_density_bias=0.0,
        capping_function="exponential", weight_function="product",
        hard_background=False, default_bg_color=(0.0,), block_rays=4096):
    # input checks (host side, mirroring _check_raymarcher_inputs)
    assert rays_densities.shape[-1] == 1
    assert rays_features.shape[:-1] == rays_densities.shape[:-1]
    assert ray_lengths.shape == rays_densities.shape[:-1]
    assert capping_function in ("exponential", "cap1")
    assert weight_function in ("product", "minimum")
    if density_noise_std > 0.0:
        raise NotImplementedError(
            "density_noise_std > 0 is not supported by the Pallas kernel.")
    if hard_background:
        raise NotImplementedError(
            "hard_background=True is not supported by the Pallas kernel.")

    batch_shape = rays_densities.shape[:-2]
    P = rays_densities.shape[-2]
    F = rays_features.shape[-1]
    N = int(np.prod(batch_shape)) if batch_shape else 1
    st = int(surface_thickness)

    # Lane packing: put `rpack` whole rays side by side on the lane axis so the
    # dominant streams are >=128 lanes dense.  Falls back to 1 when P does not
    # divide 128 or N is not divisible (still correct, just less dense).
    rpack = 128 // P if (P <= 128 and 128 % P == 0) else 1
    rpack = max(1, math.gcd(rpack, N))
    NR = N // rpack
    L = rpack * P
    RF = rpack * F
    LF = L * F

    # Pure row-major reshapes into the packed layout (no element reordering,
    # no extra host-side compute passes).
    dens = rays_densities.reshape(NR, L)
    lens = ray_lengths.reshape(NR, L)
    dirs = ray_directions.reshape(NR, rpack * 3)
    feats = rays_features.reshape(NR, LF)

    # background color, replicated once per packed ray
    if bg_color is None:
        bg_color = jnp.asarray(default_bg_color, dtype=jnp.float32)
    bg_color = jnp.asarray(bg_color, dtype=jnp.float32).reshape(-1)
    if bg_color.shape[0] == 1:
        bg_vec = jnp.broadcast_to(bg_color, (F,))
    elif bg_color.shape[0] == F:
        bg_vec = bg_color
    else:
        raise ValueError(
            f"Wrong number of background color channels: {bg_color.shape} "
            f"vs. feature dim {F}.")
    bg_row = jnp.tile(bg_vec, (rpack,)).reshape(1, RF)

    consts_np = _const_mats(P, F, rpack, st)
    (shiftm, trim, dnormm, expw, redf, redr, expo, lastm, initm) = [
        jnp.asarray(m) for m in consts_np]

    # ---- tile-size selection (rows of `rpack` rays) ----
    align = 8
    for x in (dens, lens, dirs, feats):
        align = max(align, 8 * max(1, 4 // max(1, x.dtype.itemsize)))
    rows = max(align, (max(block_rays, rpack) // rpack // align) * align)
    rows = min(rows, NR)
    if rows < NR:
        rows = max(align, (rows // align) * align)
    # keep >= 2 grid steps when possible so the "parallel" axis can shard
    # across both TensorCores on v7x (single mega-tile would serialize).
    if NR >= 2 * align:
        half = (((NR + 1) // 2) + align - 1) // align * align
        rows = min(rows, half)
    rows = max(1, min(rows, NR))

    def _pad_lanes(c):
        return ((c + 127) // 128) * 128

    def _vmem_estimate(tr):
        streams = [(L, dens.dtype.itemsize), (L, lens.dtype.itemsize),
                   (rpack * 3, dirs.dtype.itemsize), (LF, feats.dtype.itemsize),
                   (L, 4), (RF, 4), (rpack, 4), (rpack, 4)]
        step = sum(tr * _pad_lanes(w) * isz for w, isz in streams)
        cshapes = [(L, L), (L, L), (3 * rpack, L), (L, LF), (LF, RF),
                   (L, rpack), (rpack, RF), (1, L), (1, L), (1, RF)]
        cbytes = sum(((r + 7) // 8) * 8 * _pad_lanes(c) * 4 for r, c in cshapes)
        return 2 * step + 2 * cbytes          # double-buffered

    # shrink the tile if the double-buffered footprint would not leave
    # headroom inside v7x's 64 MiB VMEM
    while rows > align and _vmem_estimate(rows) > (36 << 20):
        rows = max(align, (rows // 2 // align) * align)
    vmem_limit = int(min(max(2 * _vmem_estimate(rows), 16 << 20), 40 << 20))

    grid = (pl.cdiv(NR, rows),)              # ragged last tile is fine

    kernel = functools.partial(
        _raymarch_kernel,
        background_opacity=float(background_opacity),
        density_relu=bool(density_relu),
        background_density_bias=float(background_density_bias),
        blend_output=bool(blend_output),
        capping_function=capping_function,
        weight_function=weight_function)

    mm_flops_row = 2 * (L * L + 3 * rpack * L + L * L + 2 * L * rpack
                        + L * LF + LF * RF + rpack * RF)
    flops = int(NR * (mm_flops_row + 24 * L))
    trans = int(NR * (2 * L + rpack)) if capping_function == "exponential" else 0
    bytes_in = sum(int(x.size) * x.dtype.itemsize
                   for x in (dens, lens, dirs, feats))
    bytes_const = sum(int(np.asarray(m).size) * 4 for m in consts_np) + RF * 4
    bytes_out = NR * (L + RF + 2 * rpack) * 4
    cost = pl.CostEstimate(flops=flops, transcendentals=trans,
                           bytes_accessed=int(bytes_in + bytes_const + bytes_out))

    w_out, f_out, d_out, o_out = pl.pallas_call(
        kernel,
        grid=grid,
        in_specs=[
            pl.BlockSpec((rows, L), lambda i: (i, 0)),          # densities
            pl.BlockSpec((rows, L), lambda i: (i, 0)),          # lengths
            pl.BlockSpec((rows, rpack * 3), lambda i: (i, 0)),  # directions
            pl.BlockSpec((rows, LF), lambda i: (i, 0)),         # features
            pl.BlockSpec((L, L), lambda i: (0, 0)),             # shiftm
            pl.BlockSpec((L, L), lambda i: (0, 0)),             # trim
            pl.BlockSpec((3 * rpack, L), lambda i: (0, 0)),     # dnormm
            pl.BlockSpec((L, LF), lambda i: (0, 0)),            # expw
            pl.BlockSpec((LF, RF), lambda i: (0, 0)),           # redf
            pl.BlockSpec((L, rpack), lambda i: (0, 0)),         # redr
            pl.BlockSpec((rpack, RF), lambda i: (0, 0)),        # expo
            pl.BlockSpec((1, L), lambda i: (0, 0)),             # lastm
            pl.BlockSpec((1, L), lambda i: (0, 0)),             # initm
            pl.BlockSpec((1, RF), lambda i: (0, 0)),            # bg
        ],
        out_specs=(
            pl.BlockSpec((rows, L), lambda i: (i, 0)),          # weights
            pl.BlockSpec((rows, RF), lambda i: (i, 0)),         # features
            pl.BlockSpec((rows, rpack), lambda i: (i, 0)),      # depth
            pl.BlockSpec((rows, rpack), lambda i: (i, 0)),      # opacity
        ),
        out_shape=(
            jax.ShapeDtypeStruct((NR, L), jnp.float32),
            jax.ShapeDtypeStruct((NR, RF), jnp.float32),
            jax.ShapeDtypeStruct((NR, rpack), jnp.float32),
            jax.ShapeDtypeStruct((NR, rpack), jnp.float32),
        ),
        compiler_params=pltpu.CompilerParams(
            dimension_semantics=("parallel",),
            vmem_limit_bytes=vmem_limit),
        cost_estimate=cost,
    )(dens, lens, dirs, feats, shiftm, trim, dnormm, expw, redf, redr,
      expo, lastm, initm, bg_row)

    # Pure row-major reshapes back to the module's output shapes (no slicing).
    weights = w_out.reshape(batch_shape + (P,))
    features = f_out.reshape(batch_shape + (F,))
    depths = d_out.reshape(batch_shape + (1,))
    opacities = o_out.reshape(batch_shape + (1,))
    return features, depths, opacities, weights, aux


def _reference_raymarcher(rays_densities, rays_features, ray_lengths,
                          ray_directions, bg_color=0.0, surface_thickness=1,
                          background_opacity=1e10, density_relu=True,
                          background_density_bias=0.0, blend_output=True):
    """Plain-JAX mirror of the PyTorch forward (for verification only)."""
    deltas = jnp.concatenate(
        [ray_lengths[..., 1:] - ray_lengths[..., :-1],
         background_opacity * jnp.ones_like(ray_lengths[..., :1])], axis=-1)
    deltas = deltas * jnp.linalg.norm(ray_directions, axis=-1, keepdims=True)
    d = rays_densities[..., 0]
    if density_relu:
        d = jax.nn.relu(d) + background_density_bias
    wd = deltas * d
    capped = 1.0 - jnp.exp(-wd)
    ropac = 1.0 - jnp.exp(-jnp.cumsum(wd, axis=-1))
    opac = ropac[..., -1:]
    absorb = jnp.roll(1.0 - ropac, surface_thickness, axis=-1)
    absorb = absorb.at[..., :surface_thickness].set(1.0)
    weights = capped * absorb
    depth = jnp.sum(weights * ray_lengths, axis=-1, keepdims=True)
    feat = jnp.sum(weights[..., None] * rays_features, axis=-2)
    alpha = opac if blend_output else 1.0
    feat = alpha * feat + (1 - opac) * bg_color
    return feat, depth, opac, weights


if __name__ == "__main__":
    key = jax.random.PRNGKey(0)
    k1, k2, k3, k4 = jax.random.split(key, 4)
    B, H, Wimg, P, F = 2, 8, 8, 16, 4

    rays_densities = jax.random.normal(k1, (B, H, Wimg, P, 1), dtype=jnp.float32)
    rays_features = jax.random.uniform(k2, (B, H, Wimg, P, F), dtype=jnp.float32)
    ray_lengths = jnp.sort(
        jax.random.uniform(k3, (B, H, Wimg, P), dtype=jnp.float32,
                           minval=0.5, maxval=6.0), axis=-1)
    ray_directions = jax.random.normal(k4, (B, H, Wimg, 3), dtype=jnp.float32)
    aux = {"dummy": 0}

    feats, depths, opacities, weights, aux_out = emission_absorption_raymarcher(
        rays_densities, rays_features, aux, ray_lengths, ray_directions)
    jax.block_until_ready((feats, depths, opacities, weights))

    ref_f, ref_d, ref_o, ref_w = _reference_raymarcher(
        rays_densities, rays_features, ray_lengths, ray_directions)

    np.testing.assert_allclose(np.asarray(feats), np.asarray(ref_f),
                               rtol=1e-4, atol=1e-4)
    np.testing.assert_allclose(np.asarray(depths), np.asarray(ref_d),
                               rtol=1e-4, atol=1e-4)
    np.testing.assert_allclose(np.asarray(opacities), np.asarray(ref_o),
                               rtol=1e-4, atol=1e-4)
    np.testing.assert_allclose(np.asarray(weights), np.asarray(ref_w),
                               rtol=1e-4, atol=1e-4)
    assert bool(jnp.all(weights.sum(-1) <= 1.0 + 1e-5))
    assert aux_out is aux

    # Multi-channel background color path (F channels).
    bg_rgb = jnp.asarray([0.2, 0.4, 0.6, 0.8], dtype=jnp.float32)
    feats2, depths2, opac2, w2, _ = emission_absorption_raymarcher(
        rays_densities, rays_features, aux, ray_lengths, ray_directions,
        bg_color=bg_rgb)
    jax.block_until_ready(feats2)
    ref_f2, ref_d2, ref_o2, ref_w2 = _reference_raymarcher(
        rays_densities, rays_features, ray_lengths, ray_directions,
        bg_color=bg_rgb)
    np.testing.assert_allclose(np.asarray(feats2), np.asarray(ref_f2),
                               rtol=1e-4, atol=1e-4)
    np.testing.assert_allclose(np.asarray(w2), np.asarray(ref_w2),
                               rtol=1e-4, atol=1e-4)

    print("KERNEL_OK")
</pallas_src>

<mosaic_0001>
module attributes {stable_mosaic.version = 11 : i64} {
  func.func @_raymarch_kernel(%arg0: i32, %arg1: memref<8x128xf32, #tpu.memory_space<vmem>>, %arg2: memref<8x128xf32, #tpu.memory_space<vmem>>, %arg3: memref<8x24xf32, #tpu.memory_space<vmem>>, %arg4: memref<8x512xf32, #tpu.memory_space<vmem>>, %arg5: memref<128x128xf32, #tpu.memory_space<vmem>>, %arg6: memref<128x128xf32, #tpu.memory_space<vmem>>, %arg7: memref<24x128xf32, #tpu.memory_space<vmem>>, %arg8: memref<128x512xf32, #tpu.memory_space<vmem>>, %arg9: memref<512x32xf32, #tpu.memory_space<vmem>>, %arg10: memref<128x8xf32, #tpu.memory_space<vmem>>, %arg11: memref<8x32xf32, #tpu.memory_space<vmem>>, %arg12: memref<1x128xf32, #tpu.memory_space<vmem>>, %arg13: memref<1x128xf32, #tpu.memory_space<vmem>>, %arg14: memref<1x32xf32, #tpu.memory_space<vmem>>, %arg15: memref<8x128xf32, #tpu.memory_space<vmem>>, %arg16: memref<8x32xf32, #tpu.memory_space<vmem>>, %arg17: memref<8x8xf32, #tpu.memory_space<vmem>>, %arg18: memref<8x8xf32, #tpu.memory_space<vmem>>) attributes {dimension_semantics = [#tpu.dimension_semantics<parallel>], iteration_bounds = array<i64: 2>, scalar_prefetch = 0 : i64, scratch_operands = 0 : i64, tpu.core_type = #tpu.core_type<tc>, window_params = [{transform_indices = @transform_0, window_bounds = array<i64: 8, 128>}, {transform_indices = @transform_1, window_bounds = array<i64: 8, 128>}, {transform_indices = @transform_2, window_bounds = array<i64: 8, 24>}, {transform_indices = @transform_3, window_bounds = array<i64: 8, 512>}, {pipeline_mode = #tpu.pipeline_mode<synchronous>, transform_indices = @transform_4, window_bounds = array<i64: 128, 128>}, {pipeline_mode = #tpu.pipeline_mode<synchronous>, transform_indices = @transform_5, window_bounds = array<i64: 128, 128>}, {pipeline_mode = #tpu.pipeline_mode<synchronous>, transform_indices = @transform_6, window_bounds = array<i64: 24, 128>}, {pipeline_mode = #tpu.pipeline_mode<synchronous>, transform_indices = @transform_7, window_bounds = array<i64: 128, 512>}, {pipeline_mode = #tpu.pipeline_mode<synchronous>, transform_indices = @transform_8, window_bounds = array<i64: 512, 32>}, {pipeline_mode = #tpu.pipeline_mode<synchronous>, transform_indices = @transform_9, window_bounds = array<i64: 128, 8>}, {pipeline_mode = #tpu.pipeline_mode<synchronous>, transform_indices = @transform_10, window_bounds = array<i64: 8, 32>}, {pipeline_mode = #tpu.pipeline_mode<synchronous>, transform_indices = @transform_11, window_bounds = array<i64: 1, 128>}, {pipeline_mode = #tpu.pipeline_mode<synchronous>, transform_indices = @transform_12, window_bounds = array<i64: 1, 128>}, {pipeline_mode = #tpu.pipeline_mode<synchronous>, transform_indices = @transform_13, window_bounds = array<i64: 1, 32>}, {transform_indices = @transform_14, window_bounds = array<i64: 8, 128>}, {transform_indices = @transform_15, window_bounds = array<i64: 8, 32>}, {transform_indices = @transform_16, window_bounds = array<i64: 8, 8>}, {transform_indices = @transform_17, window_bounds = array<i64: 8, 8>}]} {
    %c0 = arith.constant 0 : index
    %c0_0 = arith.constant 0 : index
    %0 = vector.load %arg1[%c0, %c0_0] : memref<8x128xf32, #tpu.memory_space<vmem>>, vector<8x128xf32>
    %c0_1 = arith.constant 0 : index
    %c0_2 = arith.constant 0 : index
    %1 = vector.load %arg2[%c0_1, %c0_2] : memref<8x128xf32, #tpu.memory_space<vmem>>, vector<8x128xf32>
    %c0_3 = arith.constant 0 : index
    %c0_4 = arith.constant 0 : index
    %2 = vector.load %arg3[%c0_3, %c0_4] : memref<8x24xf32, #tpu.memory_space<vmem>>, vector<8x24xf32>
    %c0_5 = arith.constant 0 : index
    %c0_6 = arith.constant 0 : index
    %3 = vector.load %arg4[%c0_5, %c0_6] : memref<8x512xf32, #tpu.memory_space<vmem>>, vector<8x512xf32>
    %c0_7 = arith.constant 0 : index
    %c0_8 = arith.constant 0 : index
    %4 = vector.load %arg12[%c0_7, %c0_8] : memref<1x128xf32, #tpu.memory_space<vmem>>, vector<1x128xf32>
    %c0_9 = arith.constant 0 : index
    %c0_10 = arith.constant 0 : index
    %5 = vector.load %arg13[%c0_9, %c0_10] : memref<1x128xf32, #tpu.memory_space<vmem>>, vector<1x128xf32>
    %c0_11 = arith.constant 0 : index
    %c0_12 = arith.constant 0 : index
    %6 = vector.load %arg14[%c0_11, %c0_12] : memref<1x32xf32, #tpu.memory_space<vmem>>, vector<1x32xf32>
    %c0_13 = arith.constant 0 : index
    %c0_14 = arith.constant 0 : index
    %7 = vector.load %arg5[%c0_13, %c0_14] : memref<128x128xf32, #tpu.memory_space<vmem>>, vector<128x128xf32>
    %cst = arith.constant dense<0.000000e+00> : vector<8x128xf32>
    %8 = tpu.matmul %1, %7, %cst {dimension_numbers = #tpu.dot_dimension_numbers<[1], [0], [0], [1], [0, 0, 1, 1], [], []>} : vector<8x128xf32>, vector<128x128xf32>, vector<8x128xf32> -> vector<8x128xf32>
    %9 = arith.mulf %2, %2 : vector<8x24xf32>
    %c0_15 = arith.constant 0 : index
    %c0_16 = arith.constant 0 : index
    %10 = vector.load %arg7[%c0_15, %c0_16] : memref<24x128xf32, #tpu.memory_space<vmem>>, vector<24x128xf32>
    %cst_17 = arith.constant dense<0.000000e+00> : vector<8x128xf32>
    %11 = tpu.matmul %9, %10, %cst_17 {dimension_numbers = #tpu.dot_dimension_numbers<[1], [0], [0], [1], [0, 0, 1, 1], [], []>} : vector<8x24xf32>, vector<24x128xf32>, vector<8x128xf32> -> vector<8x128xf32>
    %12 = math.sqrt %11 : vector<8x128xf32>
    %13 = arith.subf %8, %1 : vector<8x128xf32>
    %cst_18 = arith.constant 1.000000e+00 : f32
    %14 = vector.broadcast %cst_18 : f32 to vector<1x128xf32>
    %15 = arith.subf %14, %4 : vector<1x128xf32>
    %16 = vector.broadcast %15 : vector<1x128xf32> to vector<8x128xf32>
    %17 = arith.mulf %13, %16 : vector<8x128xf32>
    %cst_19 = arith.constant 1.000000e+10 : f32
    %18 = vector.broadcast %cst_19 : f32 to vector<1x128xf32>
    %19 = arith.mulf %18, %4 : vector<1x128xf32>
    %20 = vector.broadcast %19 : vector<1x128xf32> to vector<8x128xf32>
    %21 = arith.addf %17, %20 : vector<8x128xf32>
    %22 = arith.mulf %21, %12 : vector<8x128xf32>
    %cst_20 = arith.constant 0.000000e+00 : f32
    %23 = vector.broadcast %cst_20 : f32 to vector<8x128xf32>
    %24 = arith.maximumf %0, %23 : vector<8x128xf32>
    %cst_21 = arith.constant 0.000000e+00 : f32
    %25 = vector.broadcast %cst_21 : f32 to vector<8x128xf32>
    %26 = arith.addf %24, %25 : vector<8x128xf32>
    %27 = arith.mulf %22, %26 : vector<8x128xf32>
    %cst_22 = arith.constant 0.000000e+00 : f32
    %28 = vector.broadcast %cst_22 : f32 to vector<8x128xf32>
    %29 = arith.subf %28, %27 : vector<8x128xf32>
    %30 = math.exp %29 : vector<8x128xf32>
    %cst_23 = arith.constant 1.000000e+00 : f32
    %31 = vector.broadcast %cst_23 : f32 to vector<8x128xf32>
    %32 = arith.subf %31, %30 : vector<8x128xf32>
    %c0_24 = arith.constant 0 : index
    %c0_25 = arith.constant 0 : index
    %33 = vector.load %arg6[%c0_24, %c0_25] : memref<128x128xf32, #tpu.memory_space<vmem>>, vector<128x128xf32>
    %cst_26 = arith.constant dense<0.000000e+00> : vector<8x128xf32>
    %34 = tpu.matmul %27, %33, %cst_26 {dimension_numbers = #tpu.dot_dimension_numbers<[1], [0], [0], [1], [0, 0, 1, 1], [], []>} : vector<8x128xf32>, vector<128x128xf32>, vector<8x128xf32> -> vector<8x128xf32>
    %cst_27 = arith.constant 1.000000e+00 : f32
    %35 = vector.broadcast %cst_27 : f32 to vector<1x128xf32>
    %36 = arith.subf %35, %5 : vector<1x128xf32>
    %cst_28 = arith.constant 0.000000e+00 : f32
    %37 = vector.broadcast %cst_28 : f32 to vector<8x128xf32>
    %38 = arith.subf %37, %34 : vector<8x128xf32>
    %39 = math.exp %38 : vector<8x128xf32>
    %cst_29 = arith.constant 1.000000e+00 : f32
    %40 = vector.broadcast %cst_29 : f32 to vector<8x128xf32>
    %41 = arith.subf %40, %39 : vector<8x128xf32>
    %cst_30 = arith.constant 1.000000e+00 : f32
    %42 = vector.broadcast %cst_30 : f32 to vector<8x128xf32>
    %43 = arith.subf %42, %41 : vector<8x128xf32>
    %44 = vector.broadcast %36 : vector<1x128xf32> to vector<8x128xf32>
    %45 = arith.mulf %44, %43 : vector<8x128xf32>
    %46 = vector.broadcast %5 : vector<1x128xf32> to vector<8x128xf32>
    %47 = arith.addf %46, %45 : vector<8x128xf32>
    %48 = arith.mulf %32, %47 : vector<8x128xf32>
    %c0_31 = arith.constant 0 : index
    %c0_32 = arith.constant 0 : index
    %49 = vector.load %arg15[%c0_31, %c0_32] : memref<8x128xf32, #tpu.memory_space<vmem>>, vector<8x128xf32>
    tpu.vector_store %arg15[%c0_31, %c0_32], %48 {strides = array<i32>} : memref<8x128xf32, #tpu.memory_space<vmem>>, vector<8x128xf32>,
    %c0_33 = arith.constant 0 : index
    %c0_34 = arith.constant 0 : index
    %50 = vector.load %arg10[%c0_33, %c0_34] : memref<128x8xf32, #tpu.memory_space<vmem>>, vector<128x8xf32>
    %cst_35 = arith.constant dense<0.000000e+00> : vector<8x8xf32>
    %51 = tpu.matmul %27, %50, %cst_35 {dimension_numbers = #tpu.dot_dimension_numbers<[1], [0], [0], [1], [0, 0, 1, 1], [], []>} : vector<8x128xf32>, vector<128x8xf32>, vector<8x8xf32> -> vector<8x8xf32>
    %cst_36 = arith.constant 0.000000e+00 : f32
    %52 = vector.broadcast %cst_36 : f32 to vector<8x8xf32>
    %53 = arith.subf %52, %51 : vector<8x8xf32>
    %54 = math.exp %53 : vector<8x8xf32>
    %cst_37 = arith.constant 1.000000e+00 : f32
    %55 = vector.broadcast %cst_37 : f32 to vector<8x8xf32>
    %56 = arith.subf %55, %54 : vector<8x8xf32>
    %c0_38 = arith.constant 0 : index
    %c0_39 = arith.constant 0 : index
    %57 = vector.load %arg18[%c0_38, %c0_39] : memref<8x8xf32, #tpu.memory_space<vmem>>, vector<8x8xf32>
    tpu.vector_store %arg18[%c0_38, %c0_39], %56 {strides = array<i32>} : memref<8x8xf32, #tpu.memory_space<vmem>>, vector<8x8xf32>,
    %58 = arith.mulf %48, %1 : vector<8x128xf32>
    %cst_40 = arith.constant dense<0.000000e+00> : vector<8x8xf32>
    %59 = tpu.matmul %58, %50, %cst_40 {dimension_numbers = #tpu.dot_dimension_numbers<[1], [0], [0], [1], [0, 0, 1, 1], [], []>} : vector<8x128xf32>, vector<128x8xf32>, vector<8x8xf32> -> vector<8x8xf32>
    %c0_41 = arith.constant 0 : index
    %c0_42 = arith.constant 0 : index
    %60 = vector.load %arg17[%c0_41, %c0_42] : memref<8x8xf32, #tpu.memory_space<vmem>>, vector<8x8xf32>
    tpu.vector_store %arg17[%c0_41, %c0_42], %59 {strides = array<i32>} : memref<8x8xf32, #tpu.memory_space<vmem>>, vector<8x8xf32>,
    %c0_43 = arith.constant 0 : index
    %c0_44 = arith.constant 0 : index
    %61 = vector.load %arg8[%c0_43, %c0_44] : memref<128x512xf32, #tpu.memory_space<vmem>>, vector<128x512xf32>
    %cst_45 = arith.constant dense<0.000000e+00> : vector<8x512xf32>
    %62 = tpu.matmul %48, %61, %cst_45 {dimension_numbers = #tpu.dot_dimension_numbers<[1], [0], [0], [1], [0, 0, 1, 1], [], []>} : vector<8x128xf32>, vector<128x512xf32>, vector<8x512xf32> -> vector<8x512xf32>
    %63 = arith.mulf %62, %3 : vector<8x512xf32>
    %c0_46 = arith.constant 0 : index
    %c0_47 = arith.constant 0 : index
    %64 = vector.load %arg9[%c0_46, %c0_47] : memref<512x32xf32, #tpu.memory_space<vmem>>, vector<512x32xf32>
    %cst_48 = arith.constant dense<0.000000e+00> : vector<8x32xf32>
    %65 = tpu.matmul %63, %64, %cst_48 {dimension_numbers = #tpu.dot_dimension_numbers<[1], [0], [0], [1], [0, 0, 1, 1], [], []>} : vector<8x512xf32>, vector<512x32xf32>, vector<8x32xf32> -> vector<8x32xf32>
    %c0_49 = arith.constant 0 : index
    %c0_50 = arith.constant 0 : index
    %66 = vector.load %arg11[%c0_49, %c0_50] : memref<8x32xf32, #tpu.memory_space<vmem>>, vector<8x32xf32>
    %cst_51 = arith.constant dense<0.000000e+00> : vector<8x32xf32>
    %67 = tpu.matmul %56, %66, %cst_51 {dimension_numbers = #tpu.dot_dimension_numbers<[1], [0], [0], [1], [0, 0, 1, 1], [], []>} : vector<8x8xf32>, vector<8x32xf32>, vector<8x32xf32> -> vector<8x32xf32>
    %68 = arith.mulf %67, %65 : vector<8x32xf32>
    %cst_52 = arith.constant 1.000000e+00 : f32
    %69 = vector.broadcast %cst_52 : f32 to vector<8x32xf32>
    %70 = arith.subf %69, %67 : vector<8x32xf32>
    %71 = vector.broadcast %6 : vector<1x32xf32> to vector<8x32xf32>
    %72 = arith.mulf %70, %71 : vector<8x32xf32>
    %73 = arith.addf %68, %72 : vector<8x32xf32>
    %c0_53 = arith.constant 0 : index
    %c0_54 = arith.constant 0 : index
    %74 = vector.load %arg16[%c0_53, %c0_54] : memref<8x32xf32, #tpu.memory_space<vmem>>, vector<8x32xf32>
    tpu.vector_store %arg16[%c0_53, %c0_54], %73 {strides = array<i32>} : memref<8x32xf32, #tpu.memory_space<vmem>>, vector<8x32xf32>,
    return
  }
  func.func @transform_0(%arg0: i32) -> (i32, i32) {
    %c0_i32 = arith.constant 0 : i32
    %c0_i32_0 = arith.constant 0 : i32
    return %arg0, %c0_i32 : i32, i32
  }
  func.func @transform_1(%arg0: i32) -> (i32, i32) {
    %c0_i32 = arith.constant 0 : i32
    %c0_i32_0 = arith.constant 0 : i32
    return %arg0, %c0_i32 : i32, i32
  }
  func.func @transform_2(%arg0: i32) -> (i32, i32) {
    %c0_i32 = arith.constant 0 : i32
    %c0_i32_0 = arith.constant 0 : i32
    return %arg0, %c0_i32 : i32, i32
  }
  func.func @transform_3(%arg0: i32) -> (i32, i32) {
    %c0_i32 = arith.constant 0 : i32
    %c0_i32_0 = arith.constant 0 : i32
    return %arg0, %c0_i32 : i32, i32
  }
  func.func @transform_4(%arg0: i32) -> (i32, i32) {
    %c0_i32 = arith.constant 0 : i32
    %c0_i32_0 = arith.constant 0 : i32
    %c0_i32_1 = arith.constant 0 : i32
    return %c0_i32, %c0_i32_0 : i32, i32
  }
  func.func @transform_5(%arg0: i32) -> (i32, i32) {
    %c0_i32 = arith.constant 0 : i32
    %c0_i32_0 = arith.constant 0 : i32
    %c0_i32_1 = arith.constant 0 : i32
    return %c0_i32, %c0_i32_0 : i32, i32
  }
  func.func @transform_6(%arg0: i32) -> (i32, i32) {
    %c0_i32 = arith.constant 0 : i32
    %c0_i32_0 = arith.constant 0 : i32
    %c0_i32_1 = arith.constant 0 : i32
    return %c0_i32, %c0_i32_0 : i32, i32
  }
  func.func @transform_7(%arg0: i32) -> (i32, i32) {
    %c0_i32 = arith.constant 0 : i32
    %c0_i32_0 = arith.constant 0 : i32
    %c0_i32_1 = arith.constant 0 : i32
    return %c0_i32, %c0_i32_0 : i32, i32
  }
  func.func @transform_8(%arg0: i32) -> (i32, i32) {
    %c0_i32 = arith.constant 0 : i32
    %c0_i32_0 = arith.constant 0 : i32
    %c0_i32_1 = arith.constant 0 : i32
    return %c0_i32, %c0_i32_0 : i32, i32
  }
  func.func @transform_9(%arg0: i32) -> (i32, i32) {
    %c0_i32 = arith.constant 0 : i32
    %c0_i32_0 = arith.constant 0 : i32
    %c0_i32_1 = arith.constant 0 : i32
    return %c0_i32, %c0_i32_0 : i32, i32
  }
  func.func @transform_10(%arg0: i32) -> (i32, i32) {
    %c0_i32 = arith.constant 0 : i32
    %c0_i32_0 = arith.constant 0 : i32
    %c0_i32_1 = arith.constant 0 : i32
    return %c0_i32, %c0_i32_0 : i32, i32
  }
  func.func @transform_11(%arg0: i32) -> (i32, i32) {
    %c0_i32 = arith.constant 0 : i32
    %c0_i32_0 = arith.constant 0 : i32
    %c0_i32_1 = arith.constant 0 : i32
    return %c0_i32, %c0_i32_0 : i32, i32
  }
  func.func @transform_12(%arg0: i32) -> (i32, i32) {
    %c0_i32 = arith.constant 0 : i32
    %c0_i32_0 = arith.constant 0 : i32
    %c0_i32_1 = arith.constant 0 : i32
    return %c0_i32, %c0_i32_0 : i32, i32
  }
  func.func @transform_13(%arg0: i32) -> (i32, i32) {
    %c0_i32 = arith.constant 0 : i32
    %c0_i32_0 = arith.constant 0 : i32
    %c0_i32_1 = arith.constant 0 : i32
    return %c0_i32, %c0_i32_0 : i32, i32
  }
  func.func @transform_14(%arg0: i32) -> (i32, i32) {
    %c0_i32 = arith.constant 0 : i32
    %c0_i32_0 = arith.constant 0 : i32
    return %arg0, %c0_i32 : i32, i32
  }
  func.func @transform_15(%arg0: i32) -> (i32, i32) {
    %c0_i32 = arith.constant 0 : i32
    %c0_i32_0 = arith.constant 0 : i32
    return %arg0, %c0_i32 : i32, i32
  }
  func.func @transform_16(%arg0: i32) -> (i32, i32) {
    %c0_i32 = arith.constant 0 : i32
    %c0_i32_0 = arith.constant 0 : i32
    return %arg0, %c0_i32 : i32, i32
  }
  func.func @transform_17(%arg0: i32) -> (i32, i32) {
    %c0_i32 = arith.constant 0 : i32
    %c0_i32_0 = arith.constant 0 : i32
    return %arg0, %c0_i32 : i32, i32
  }
}

</mosaic_0001>

<llo_original>
// kernel: tpu_custom_call.1
$region0: #{tpu_custom_call.1}
  #allocation0 [shape = 'u32[]', space=smem, size = 0x4, offset = 0x4, fixed_abs, tag = 'smem constant byte address 0x4 - core index']
  #allocation1 [shape = 'u32[144,128]{1,0:T(1,128)}', space=vmem, size = 0x12000, scoped, tag = 'internal scratch']
  %s0 = inlined_call_operand.vmem [shape: f32[16,128], index: 0, kind: input, shape index: {}]
  %s1 = inlined_call_operand.hbm [shape: f32[16,128], index: 1, kind: input, shape index: {}]
  %s2 = inlined_call_operand.hbm [shape: f32[16,24], index: 2, kind: input, shape index: {}]
  %s3 = inlined_call_operand.hbm [shape: f32[16,512], index: 3, kind: input, shape index: {}]
  %s4 = inlined_call_operand.vmem [shape: f32[128,128], index: 4, kind: input, shape index: {}]
  %s5 = inlined_call_operand.vmem [shape: f32[128,128], index: 5, kind: input, shape index: {}]
  %s6 = inlined_call_operand.hbm [shape: f32[24,128], index: 6, kind: input, shape index: {}]
  %s7 = inlined_call_operand.vmem [shape: f32[128,512], index: 7, kind: input, shape index: {}]
  %s8 = inlined_call_operand.vmem [shape: f32[512,32], index: 8, kind: input, shape index: {}]
  %s9 = inlined_call_operand.vmem [shape: f32[128,8], index: 9, kind: input, shape index: {}]
  %s10 = inlined_call_operand.vmem [shape: f32[8,32], index: 10, kind: input, shape index: {}]
  %s11 = inlined_call_operand.vmem [shape: f32[1,128], index: 11, kind: input, shape index: {}]
  %s12 = inlined_call_operand.vmem [shape: f32[1,128], index: 12, kind: input, shape index: {}]
  %s13 = inlined_call_operand.hbm [shape: f32[1,32], index: 13, kind: input, shape index: {}]
  %s14 = inlined_call_operand.hbm [shape: f32[16,128], index: 14, kind: output, shape index: {0}]
  %s15 = inlined_call_operand.hbm [shape: f32[16,32], index: 15, kind: output, shape index: {1}]
  %s16 = inlined_call_operand.vmem [shape: f32[16,8], index: 16, kind: output, shape index: {2}]
  %s17 = inlined_call_operand.vmem [shape: f32[16,8], index: 17, kind: output, shape index: {3}]
  %18 = xla_tuple %s14, %s15, %s16, %s17
  %s19 = sld [smem:[#allocation0]]
  $region133: #{tpu_custom_call.1} parent=0
    _
  %s21 = ssub.s32 1, %s19
  %s22 = scalar_select 0, %s21, %s19
  $region1: #{tpu_custom_call.1} parent=0
    #allocation2 [shape = 'u8[8192]{0}', space=vmem, size = 0x2000, scoped, tag = 'input window, operand 1']
    #allocation3 [shape = 's32[2]{0}', space=sflag, size = 0x8, scoped, tag = 'scoped memory for tpu_custom_call.1']
    #allocation4 [shape = 's32[2]{0}', space=sflag, size = 0x8, scoped, tag = 'scoped memory for tpu_custom_call.1']
    #allocation5 [shape = 'u8[8192]{0}', space=vmem, size = 0x2000, scoped, tag = 'input window, operand 2']
    #allocation6 [shape = 's32[2]{0}', space=sflag, size = 0x8, scoped, tag = 'scoped memory for tpu_custom_call.1']
    #allocation7 [shape = 'u8[32768]{0}', space=vmem, size = 0x8000, scoped, tag = 'input window, operand 3']
    #allocation8 [shape = 'u8[12288]{0}', space=vmem, size = 0x3000, scoped, tag = 'input window, operand 6, single buffered']
    #allocation9 [shape = 's32[1]{0}', space=sflag, size = 0x4, scoped, tag = 'scoped memory for tpu_custom_call.1']
    #allocation10 [shape = 'u8[512]{0}', space=vmem, size = 0x400, scoped, tag = 'input window, operand 13, single buffered']
    #allocation11 [shape = 'u8[8192]{0}', space=vmem, size = 0x2000, scoped, tag = 'output window, operand 0']
    #allocation12 [shape = 'u8[8192]{0}', space=vmem, size = 0x2000, scoped, tag = 'output window, operand 1']
    #allocation13 [shape = 's32[2]{0}', space=sflag, size = 0x8, scoped, tag = 'scoped memory for tpu_custom_call.1']
    %23 = vsyncpa [#allocation3], 0
    %s24 = scalar_lea.sflag [#allocation3], 1
    %25 = vsyncpa %s24, 0
    %26 = vsyncpa [#allocation6], 0
    %s27 = scalar_lea.sflag [#allocation6], 1
    %28 = vsyncpa %s27, 0
    %29 = vsyncpa [#allocation9], 0
    %30 = vsyncpa [#allocation4], 0
    %s31 = scalar_lea.sflag [#allocation4], 1
    %32 = vsyncpa %s31, 0
    %33 = vsyncpa [#allocation13], 0
    %s34 = scalar_lea.sflag [#allocation13], 1
    %35 = vsyncpa %s34, 0
    loop: start=0, step=1, limit=4
    $region2: #{tpu_custom_call.1} parent=1 // loop_pre_header
      _
    $region3: #{tpu_custom_call.1} parent=1 // loop_header
      %s37 = sphi 0, %s41
      %p38 = scmp.ge.s32.totalorder %s37, 4
      %s47 = sphi 0, %s49
      %s50 = sphi 0, %s47
      %s51 = sphi 0, %s50
      %s67 = sphi 0, %s51
      %s73 = sphi 0, %s75
      %s76 = sphi 0, %s73
      %s77 = sphi 0, %s76
      %s93 = sphi 0, %s77
      %s99 = sphi 0, %s101
      %s102 = sphi 0, %s99
      %s103 = sphi 0, %s102
      %s119 = sphi 0, %s103
      %s125 = sphi 0, %s127
      %s128 = sphi 0, %s125
      %s129 = sphi 0, %s128
      %s145 = sphi 0, %s129
      %s149 = sphi 0, %s149
      %s151 = sphi 0, %s149
      %s152 = sphi 0, %s151
      %s166 = sphi 0, %s152
      %s170 = sphi 0, %s170
      %s172 = sphi 0, %s170
      %s173 = sphi 0, %s172
      %s187 = sphi 0, %s173
      %s191 = sphi 0, %s191
      %s193 = sphi 0, %s191
      %s194 = sphi 0, %s193
      %s208 = sphi 0, %s194
      %s212 = sphi 0, %s212
      %s214 = sphi 0, %s212
      %s215 = sphi 0, %s214
      %s229 = sphi 0, %s215
      %s233 = sphi 0, %s233
      %s235 = sphi 0, %s233
      %s236 = sphi 0, %s235
      %s250 = sphi 0, %s236
      %s254 = sphi 0, %s254
      %s256 = sphi 0, %s254
      %s257 = sphi 0, %s256
      %s271 = sphi 0, %s257
      %s275 = sphi 0, %s275
      %s277 = sphi 0, %s275
      %s278 = sphi 0, %s277
      %s292 = sphi 0, %s278
      %s296 = sphi 0, %s296
      %s298 = sphi 0, %s296
      %s299 = sphi 0, %s298
      %s313 = sphi 0, %s299
      %s317 = sphi 0, %s317
      %s319 = sphi 0, %s317
      %s320 = sphi 0, %s319
      %s334 = sphi 0, %s320
      %s338 = sphi 0, %s338
      %s340 = sphi 0, %s338
      %s341 = sphi 0, %s340
      %s355 = sphi 0, %s341
      %s361 = sphi 0, %s363
      %s364 = sphi 0, %s361
      %s365 = sphi 0, %s364
      %s381 = sphi 0, %s365
      %s387 = sphi 0, %s389
      %s390 = sphi 0, %s387
      %s391 = sphi 0, %s390
      %s407 = sphi 0, %s391
      %s413 = sphi 0, %s415
      %s416 = sphi 0, %s413
      %s417 = sphi 0, %s416
      %s433 = sphi 0, %s417
      %s439 = sphi 0, %s441
      %s442 = sphi 0, %s439
      %s443 = sphi 0, %s442
      %s459 = sphi 0, %s443
    $region4: #{tpu_custom_call.1} parent=1 // loop_header_branch
      %40 = sbr.rel (%p38) target = $region8
    $region5: #{tpu_custom_call.1} parent=1 // loop_body
      %s42 = ssub.s32 %s37, 1
      %s43 = ssub.s32 %s37, 2
      %s44 = sadd.s32 %s37, 1
      %s45 = ssub.s32 %s37, %s44
      %p46 = scmp.eq.s32.totalorder %s45, 0
      %s48 = sadd.s32 %s47, 1
      %s49 = scalar_select %p46, %s47, %s48
      %p52 = pneg %p46
      %p53 = scmp.eq.s32.totalorder %s37, 1
      %p54 = por %p52, %p53
      %p55 = scmp.ne.s32.totalorder %s47, %s50
      %p56 = scmp.eq.s32.totalorder %s37, 0
      %p57 = por %p55, %p56
      %p58 = scmp.ne.s32.totalorder %s47, %s50
      %p59 = scmp.eq.s32.totalorder %s42, 1
      %p60 = por %p58, %p59
      %p61 = scmp.ne.s32.totalorder %s50, %s51
      %p62 = scmp.eq.s32.totalorder %s42, 0
      %p63 = por %p61, %p62
      %p64 = scmp.ne.s32.totalorder %s50, %s51
      %p65 = scmp.eq.s32.totalorder %s43, 1
      %p66 = por %p64, %p65
      %p68 = scmp.ne.s32.totalorder %s51, %s67
      %p69 = scmp.eq.s32.totalorder %s43, 0
      %p70 = por %p68, %p69
      %s71 = ssub.s32 %s37, %s44
      %p72 = scmp.eq.s32.totalorder %s71, 0
      %s74 = sadd.s32 %s73, 1
      %s75 = scalar_select %p72, %s73, %s74
      %p78 = pneg %p72
      %p79 = scmp.eq.s32.totalorder %s37, 1
      %p80 = por %p78, %p79
      %p81 = scmp.ne.s32.totalorder %s73, %s76
      %p82 = scmp.eq.s32.totalorder %s37, 0
      %p83 = por %p81, %p82
      %p84 = scmp.ne.s32.totalorder %s73, %s76
      %p85 = scmp.eq.s32.totalorder %s42, 1
      %p86 = por %p84, %p85
      %p87 = scmp.ne.s32.totalorder %s76, %s77
      %p88 = scmp.eq.s32.totalorder %s42, 0
      %p89 = por %p87, %p88
      %p90 = scmp.ne.s32.totalorder %s76, %s77
      %p91 = scmp.eq.s32.totalorder %s43, 1
      %p92 = por %p90, %p91
      %p94 = scmp.ne.s32.totalorder %s77, %s93
      %p95 = scmp.eq.s32.totalorder %s43, 0
      %p96 = por %p94, %p95
      %s97 = ssub.s32 %s37, %s44
      %p98 = scmp.eq.s32.totalorder %s97, 0
      %s100 = sadd.s32 %s99, 1
      %s101 = scalar_select %p98, %s99, %s100
      %p104 = pneg %p98
      %p105 = scmp.eq.s32.totalorder %s37, 1
      %p106 = por %p104, %p105
      %p107 = scmp.ne.s32.totalorder %s99, %s102
      %p108 = scmp.eq.s32.totalorder %s37, 0
      %p109 = por %p107, %p108
      %p110 = scmp.ne.s32.totalorder %s99, %s102
      %p111 = scmp.eq.s32.totalorder %s42, 1
      %p112 = por %p110, %p111
      %p113 = scmp.ne.s32.totalorder %s102, %s103
      %p114 = scmp.eq.s32.totalorder %s42, 0
      %p115 = por %p113, %p114
      %p116 = scmp.ne.s32.totalorder %s102, %s103
      %p117 = scmp.eq.s32.totalorder %s43, 1
      %p118 = por %p116, %p117
      %p120 = scmp.ne.s32.totalorder %s103, %s119
      %p121 = scmp.eq.s32.totalorder %s43, 0
      %p122 = por %p120, %p121
      %s123 = ssub.s32 %s37, %s44
      %p124 = scmp.eq.s32.totalorder %s123, 0
      %s126 = sadd.s32 %s125, 1
      %s127 = scalar_select %p124, %s125, %s126
      %p130 = pneg %p124
      %p131 = scmp.eq.s32.totalorder %s37, 1
      %p132 = por %p130, %p131
      %p133 = scmp.ne.s32.totalorder %s125, %s128
      %p134 = scmp.eq.s32.totalorder %s37, 0
      %p135 = por %p133, %p134
      %p136 = scmp.ne.s32.totalorder %s125, %s128
      %p137 = scmp.eq.s32.totalorder %s42, 1
      %p138 = por %p136, %p137
      %p139 = scmp.ne.s32.totalorder %s128, %s129
      %p140 = scmp.eq.s32.totalorder %s42, 0
      %p141 = por %p139, %p140
      %p142 = scmp.ne.s32.totalorder %s128, %s129
      %p143 = scmp.eq.s32.totalorder %s43, 1
      %p144 = por %p142, %p143
      %p146 = scmp.ne.s32.totalorder %s129, %s145
      %p147 = scmp.eq.s32.totalorder %s43, 0
      %p148 = por %p146, %p147
      %s150 = sadd.s32 %s149, 1
      %p153 = scmp.eq.s32.totalorder %s37, 1
      %p154 = scmp.ne.s32.totalorder %s149, %s151
      %p155 = scmp.eq.s32.totalorder %s37, 0
      %p156 = por %p154, %p155
      %p157 = scmp.ne.s32.totalorder %s149, %s151
      %p158 = scmp.eq.s32.totalorder %s42, 1
      %p159 = por %p157, %p158
      %p160 = scmp.ne.s32.totalorder %s151, %s152
      %p161 = scmp.eq.s32.totalorder %s42, 0
      %p162 = por %p160, %p161
      %p163 = scmp.ne.s32.totalorder %s151, %s152
      %p164 = scmp.eq.s32.totalorder %s43, 1
      %p165 = por %p163, %p164
      %p167 = scmp.ne.s32.totalorder %s152, %s166
      %p168 = scmp.eq.s32.totalorder %s43, 0
      %p169 = por %p167, %p168
      %s171 = sadd.s32 %s170, 1
      %p174 = scmp.eq.s32.totalorder %s37, 1
      %p175 = scmp.ne.s32.totalorder %s170, %s172
      %p176 = scmp.eq.s32.totalorder %s37, 0
      %p177 = por %p175, %p176
      %p178 = scmp.ne.s32.totalorder %s170, %s172
      %p179 = scmp.eq.s32.totalorder %s42, 1
      %p180 = por %p178, %p179
      %p181 = scmp.ne.s32.totalorder %s172, %s173
      %p182 = scmp.eq.s32.totalorder %s42, 0
      %p183 = por %p181, %p182
      %p184 = scmp.ne.s32.totalorder %s172, %s173
      %p185 = scmp.eq.s32.totalorder %s43, 1
      %p186 = por %p184, %p185
      %p188 = scmp.ne.s32.totalorder %s173, %s187
      %p189 = scmp.eq.s32.totalorder %s43, 0
      %p190 = por %p188, %p189
      %s192 = sadd.s32 %s191, 1
      %p195 = scmp.eq.s32.totalorder %s37, 1
      %p196 = scmp.ne.s32.totalorder %s191, %s193
      %p197 = scmp.eq.s32.totalorder %s37, 0
      %p198 = por %p196, %p197
      %p199 = scmp.ne.s32.totalorder %s191, %s193
      %p200 = scmp.eq.s32.totalorder %s42, 1
      %p201 = por %p199, %p200
      %p202 = scmp.ne.s32.totalorder %s193, %s194
      %p203 = scmp.eq.s32.totalorder %s42, 0
      %p204 = por %p202, %p203
      %p205 = scmp.ne.s32.totalorder %s193, %s194
      %p206 = scmp.eq.s32.totalorder %s43, 1
      %p207 = por %p205, %p206
      %p209 = scmp.ne.s32.totalorder %s194, %s208
      %p210 = scmp.eq.s32.totalorder %s43, 0
      %p211 = por %p209, %p210
      %s213 = sadd.s32 %s212, 1
      %p216 = scmp.eq.s32.totalorder %s37, 1
      %p217 = scmp.ne.s32.totalorder %s212, %s214
      %p218 = scmp.eq.s32.totalorder %s37, 0
      %p219 = por %p217, %p218
      %p220 = scmp.ne.s32.totalorder %s212, %s214
      %p221 = scmp.eq.s32.totalorder %s42, 1
      %p222 = por %p220, %p221
      %p223 = scmp.ne.s32.totalorder %s214, %s215
      %p224 = scmp.eq.s32.totalorder %s42, 0
      %p225 = por %p223, %p224
      %p226 = scmp.ne.s32.totalorder %s214, %s215
      %p227 = scmp.eq.s32.totalorder %s43, 1
      %p228 = por %p226, %p227
      %p230 = scmp.ne.s32.totalorder %s215, %s229
      %p231 = scmp.eq.s32.totalorder %s43, 0
      %p232 = por %p230, %p231
      %s234 = sadd.s32 %s233, 1
      %p237 = scmp.eq.s32.totalorder %s37, 1
      %p238 = scmp.ne.s32.totalorder %s233, %s235
      %p239 = scmp.eq.s32.totalorder %s37, 0
      %p240 = por %p238, %p239
      %p241 = scmp.ne.s32.totalorder %s233, %s235
      %p242 = scmp.eq.s32.totalorder %s42, 1
      %p243 = por %p241, %p242
      %p244 = scmp.ne.s32.totalorder %s235, %s236
      %p245 = scmp.eq.s32.totalorder %s42, 0
      %p246 = por %p244, %p245
      %p247 = scmp.ne.s32.totalorder %s235, %s236
      %p248 = scmp.eq.s32.totalorder %s43, 1
      %p249 = por %p247, %p248
      %p251 = scmp.ne.s32.totalorder %s236, %s250
      %p252 = scmp.eq.s32.totalorder %s43, 0
      %p253 = por %p251, %p252
      %s255 = sadd.s32 %s254, 1
      %p258 = scmp.eq.s32.totalorder %s37, 1
      %p259 = scmp.ne.s32.totalorder %s254, %s256
      %p260 = scmp.eq.s32.totalorder %s37, 0
      %p261 = por %p259, %p260
      %p262 = scmp.ne.s32.totalorder %s254, %s256
      %p263 = scmp.eq.s32.totalorder %s42, 1
      %p264 = por %p262, %p263
      %p265 = scmp.ne.s32.totalorder %s256, %s257
      %p266 = scmp.eq.s32.totalorder %s42, 0
      %p267 = por %p265, %p266
      %p268 = scmp.ne.s32.totalorder %s256, %s257
      %p269 = scmp.eq.s32.totalorder %s43, 1
      %p270 = por %p268, %p269
      %p272 = scmp.ne.s32.totalorder %s257, %s271
      %p273 = scmp.eq.s32.totalorder %s43, 0
      %p274 = por %p272, %p273
      %s276 = sadd.s32 %s275, 1
      %p279 = scmp.eq.s32.totalorder %s37, 1
      %p280 = scmp.ne.s32.totalorder %s275, %s277
      %p281 = scmp.eq.s32.totalorder %s37, 0
      %p282 = por %p280, %p281
      %p283 = scmp.ne.s32.totalorder %s275, %s277
      %p284 = scmp.eq.s32.totalorder %s42, 1
      %p285 = por %p283, %p284
      %p286 = scmp.ne.s32.totalorder %s277, %s278
      %p287 = scmp.eq.s32.totalorder %s42, 0
      %p288 = por %p286, %p287
      %p289 = scmp.ne.s32.totalorder %s277, %s278
      %p290 = scmp.eq.s32.totalorder %s43, 1
      %p291 = por %p289, %p290
      %p293 = scmp.ne.s32.totalorder %s278, %s292
      %p294 = scmp.eq.s32.totalorder %s43, 0
      %p295 = por %p293, %p294
      %s297 = sadd.s32 %s296, 1
      %p300 = scmp.eq.s32.totalorder %s37, 1
      %p301 = scmp.ne.s32.totalorder %s296, %s298
      %p302 = scmp.eq.s32.totalorder %s37, 0
      %p303 = por %p301, %p302
      %p304 = scmp.ne.s32.totalorder %s296, %s298
      %p305 = scmp.eq.s32.totalorder %s42, 1
      %p306 = por %p304, %p305
      %p307 = scmp.ne.s32.totalorder %s298, %s299
      %p308 = scmp.eq.s32.totalorder %s42, 0
      %p309 = por %p307, %p308
      %p310 = scmp.ne.s32.totalorder %s298, %s299
      %p311 = scmp.eq.s32.totalorder %s43, 1
      %p312 = por %p310, %p311
      %p314 = scmp.ne.s32.totalorder %s299, %s313
      %p315 = scmp.eq.s32.totalorder %s43, 0
      %p316 = por %p314, %p315
      %s318 = sadd.s32 %s317, 1
      %p321 = scmp.eq.s32.totalorder %s37, 1
      %p322 = scmp.ne.s32.totalorder %s317, %s319
      %p323 = scmp.eq.s32.totalorder %s37, 0
      %p324 = por %p322, %p323
      %p325 = scmp.ne.s32.totalorder %s317, %s319
      %p326 = scmp.eq.s32.totalorder %s42, 1
      %p327 = por %p325, %p326
      %p328 = scmp.ne.s32.totalorder %s319, %s320
      %p329 = scmp.eq.s32.totalorder %s42, 0
      %p330 = por %p328, %p329
      %p331 = scmp.ne.s32.totalorder %s319, %s320
      %p332 = scmp.eq.s32.totalorder %s43, 1
      %p333 = por %p331, %p332
      %p335 = scmp.ne.s32.totalorder %s320, %s334
      %p336 = scmp.eq.s32.totalorder %s43, 0
      %p337 = por %p335, %p336
      %s339 = sadd.s32 %s338, 1
      %p342 = scmp.eq.s32.totalorder %s37, 1
      %p343 = scmp.ne.s32.totalorder %s338, %s340
      %p344 = scmp.eq.s32.totalorder %s37, 0
      %p345 = por %p343, %p344
      %p346 = scmp.ne.s32.totalorder %s338, %s340
      %p347 = scmp.eq.s32.totalorder %s42, 1
      %p348 = por %p346, %p347
      %p349 = scmp.ne.s32.totalorder %s340, %s341
      %p350 = scmp.eq.s32.totalorder %s42, 0
      %p351 = por %p349, %p350
      %p352 = scmp.ne.s32.totalorder %s340, %s341
      %p353 = scmp.eq.s32.totalorder %s43, 1
      %p354 = por %p352, %p353
      %p356 = scmp.ne.s32.totalorder %s341, %s355
      %p357 = scmp.eq.s32.totalorder %s43, 0
      %p358 = por %p356, %p357
      %s359 = ssub.s32 %s37, %s44
      %p360 = scmp.eq.s32.totalorder %s359, 0
      %s362 = sadd.s32 %s361, 1
      %s363 = scalar_select %p360, %s361, %s362
      %p366 = pneg %p360
      %p367 = scmp.eq.s32.totalorder %s37, 1
      %p368 = por %p366, %p367
      %p369 = scmp.ne.s32.totalorder %s361, %s364
      %p370 = scmp.eq.s32.totalorder %s37, 0
      %p371 = por %p369, %p370
      %p372 = scmp.ne.s32.totalorder %s361, %s364
      %p373 = scmp.eq.s32.totalorder %s42, 1
      %p374 = por %p372, %p373
      %p375 = scmp.ne.s32.totalorder %s364, %s365
      %p376 = scmp.eq.s32.totalorder %s42, 0
      %p377 = por %p375, %p376
      %p378 = scmp.ne.s32.totalorder %s364, %s365
      %p379 = scmp.eq.s32.totalorder %s43, 1
      %p380 = por %p378, %p379
      %p382 = scmp.ne.s32.totalorder %s365, %s381
      %p383 = scmp.eq.s32.totalorder %s43, 0
      %p384 = por %p382, %p383
      %s385 = ssub.s32 %s37, %s44
      %p386 = scmp.eq.s32.totalorder %s385, 0
      %s388 = sadd.s32 %s387, 1
      %s389 = scalar_select %p386, %s387, %s388
      %p392 = pneg %p386
      %p393 = scmp.eq.s32.totalorder %s37, 1
      %p394 = por %p392, %p393
      %p395 = scmp.ne.s32.totalorder %s387, %s390
      %p396 = scmp.eq.s32.totalorder %s37, 0
      %p397 = por %p395, %p396
      %p398 = scmp.ne.s32.totalorder %s387, %s390
      %p399 = scmp.eq.s32.totalorder %s42, 1
      %p400 = por %p398, %p399
      %p401 = scmp.ne.s32.totalorder %s390, %s391
      %p402 = scmp.eq.s32.totalorder %s42, 0
      %p403 = por %p401, %p402
      %p404 = scmp.ne.s32.totalorder %s390, %s391
      %p405 = scmp.eq.s32.totalorder %s43, 1
      %p406 = por %p404, %p405
      %p408 = scmp.ne.s32.totalorder %s391, %s407
      %p409 = scmp.eq.s32.totalorder %s43, 0
      %p410 = por %p408, %p409
      %s411 = ssub.s32 %s37, %s44
      %p412 = scmp.eq.s32.totalorder %s411, 0
      %s414 = sadd.s32 %s413, 1
      %s415 = scalar_select %p412, %s413, %s414
      %p418 = pneg %p412
      %p419 = scmp.eq.s32.totalorder %s37, 1
      %p420 = por %p418, %p419
      %p421 = scmp.ne.s32.totalorder %s413, %s416
      %p422 = scmp.eq.s32.totalorder %s37, 0
      %p423 = por %p421, %p422
      %p424 = scmp.ne.s32.totalorder %s413, %s416
      %p425 = scmp.eq.s32.totalorder %s42, 1
      %p426 = por %p424, %p425
      %p427 = scmp.ne.s32.totalorder %s416, %s417
      %p428 = scmp.eq.s32.totalorder %s42, 0
      %p429 = por %p427, %p428
      %p430 = scmp.ne.s32.totalorder %s416, %s417
      %p431 = scmp.eq.s32.totalorder %s43, 1
      %p432 = por %p430, %p431
      %p434 = scmp.ne.s32.totalorder %s417, %s433
      %p435 = scmp.eq.s32.totalorder %s43, 0
      %p436 = por %p434, %p435
      %s437 = ssub.s32 %s37, %s44
      %p438 = scmp.eq.s32.totalorder %s437, 0
      %s440 = sadd.s32 %s439, 1
      %s441 = scalar_select %p438, %s439, %s440
      %p444 = pneg %p438
      %p445 = scmp.eq.s32.totalorder %s37, 1
      %p446 = por %p444, %p445
      %p447 = scmp.ne.s32.totalorder %s439, %s442
      %p448 = scmp.eq.s32.totalorder %s37, 0
      %p449 = por %p447, %p448
      %p450 = scmp.ne.s32.totalorder %s439, %s442
      %p451 = scmp.eq.s32.totalorder %s42, 1
      %p452 = por %p450, %p451
      %p453 = scmp.ne.s32.totalorder %s442, %s443
      %p454 = scmp.eq.s32.totalorder %s42, 0
      %p455 = por %p453, %p454
      %p456 = scmp.ne.s32.totalorder %s442, %s443
      %p457 = scmp.eq.s32.totalorder %s43, 1
      %p458 = por %p456, %p457
      %p460 = scmp.ne.s32.totalorder %s443, %s459
      %p461 = scmp.eq.s32.totalorder %s43, 0
      %p462 = por %p460, %p461
      %p463 = scmp.le.s32.totalorder 1, %s37
      %p464 = scmp.lt.s32.totalorder %s37, 3
      %p465 = pnand %p463, %p464
      %p466 = pneg %p465
      // Predicated region
      $region9: #{tpu_custom_call.1} parent=5 // pred_check
        _
      $region10: #{tpu_custom_call.1} parent=5 // pred_check_branch
        %468 = sbr.rel (%p465) target = $region12
      $region11: #{tpu_custom_call.1} parent=5 // pred_region
        %s469 = ssub.s32 %s37, 1
        // Predicated region
        $region13: #{tpu_custom_call.1} parent=11 // pred_check
          %p470 = pneg %p162
        $region14: #{tpu_custom_call.1} parent=11 // pred_check_branch
          %472 = sbr.rel (%p470) target = $region16
        $region15: #{tpu_custom_call.1} parent=11 // pred_region
          _
        $region16: #{tpu_custom_call.1} parent=11 // pred_fallthru
          _
        // Predicated region
        $region17: #{tpu_custom_call.1} parent=11 // pred_check
          %p473 = pneg %p183
        $region18: #{tpu_custom_call.1} parent=11 // pred_check_branch
          %475 = sbr.rel (%p473) target = $region20
        $region19: #{tpu_custom_call.1} parent=11 // pred_region
          _
        $region20: #{tpu_custom_call.1} parent=11 // pred_fallthru
          _
        // Predicated region
        $region21: #{tpu_custom_call.1} parent=11 // pred_check
          %p476 = pneg %p204
        $region22: #{tpu_custom_call.1} parent=11 // pred_check_branch
          %478 = sbr.rel (%p476) target = $region24
        $region23: #{tpu_custom_call.1} parent=11 // pred_region
          %s480 = ssub.s32 384, 384
          %481 = vsyncadd [#allocation9], %s480
          %s482 = sshll.u32 [#allocation8], 4
          %s483 = int_to_ptr.vmem [resolvable:$true] %s482
          %488 = dma.hbm_to_vmem [thread:$0]  %s6, 384, %s483, [#allocation9], 128, 128, 8
        $region24: #{tpu_custom_call.1} parent=11 // pred_fallthru
          _
        // Predicated region
        $region25: #{tpu_custom_call.1} parent=11 // pred_check
          %p489 = pneg %p225
        $region26: #{tpu_custom_call.1} parent=11 // pred_check_branch
          %491 = sbr.rel (%p489) target = $region28
        $region27: #{tpu_custom_call.1} parent=11 // pred_region
          _
        $region28: #{tpu_custom_call.1} parent=11 // pred_fallthru
          _
        // Predicated region
        $region29: #{tpu_custom_call.1} parent=11 // pred_check
          %p492 = pneg %p246
        $region30: #{tpu_custom_call.1} parent=11 // pred_check_branch
          %494 = sbr.rel (%p492) target = $region32
        $region31: #{tpu_custom_call.1} parent=11 // pred_region
          _
        $region32: #{tpu_custom_call.1} parent=11 // pred_fallthru
          _
        // Predicated region
        $region33: #{tpu_custom_call.1} parent=11 // pred_check
          %p495 = pneg %p267
        $region34: #{tpu_custom_call.1} parent=11 // pred_check_branch
          %497 = sbr.rel (%p495) target = $region36
        $region35: #{tpu_custom_call.1} parent=11 // pred_region
          _
        $region36: #{tpu_custom_call.1} parent=11 // pred_fallthru
          _
        // Predicated region
        $region37: #{tpu_custom_call.1} parent=11 // pred_check
          %p498 = pneg %p288
        $region38: #{tpu_custom_call.1} parent=11 // pred_check_branch
          %500 = sbr.rel (%p498) target = $region40
        $region39: #{tpu_custom_call.1} parent=11 // pred_region
          _
        $region40: #{tpu_custom_call.1} parent=11 // pred_fallthru
          _
        // Predicated region
        $region41: #{tpu_custom_call.1} parent=11 // pred_check
          %p501 = pneg %p309
        $region42: #{tpu_custom_call.1} parent=11 // pred_check_branch
          %503 = sbr.rel (%p501) target = $region44
        $region43: #{tpu_custom_call.1} parent=11 // pred_region
          _
        $region44: #{tpu_custom_call.1} parent=11 // pred_fallthru
          _
        // Predicated region
        $region45: #{tpu_custom_call.1} parent=11 // pred_check
          %p504 = pneg %p330
        $region46: #{tpu_custom_call.1} parent=11 // pred_check_branch
          %506 = sbr.rel (%p504) target = $region48
        $region47: #{tpu_custom_call.1} parent=11 // pred_region
          _
        $region48: #{tpu_custom_call.1} parent=11 // pred_fallthru
          _
        // Predicated region
        $region49: #{tpu_custom_call.1} parent=11 // pred_check
          %p507 = pneg %p351
        $region50: #{tpu_custom_call.1} parent=11 // pred_check_branch
          %509 = sbr.rel (%p507) target = $region52
        $region51: #{tpu_custom_call.1} parent=11 // pred_region
          %s511 = ssub.s32 16, 16
          %512 = vsyncadd [#allocation9], %s511
          %s514 = sshll.u32 [#allocation10], 4
          %s515 = int_to_ptr.vmem [resolvable:$true] %s514
          %517 = dma.hbm_to_vmem [thread:$0]  %s13, 16, %s515, [#allocation9]
        $region52: #{tpu_custom_call.1} parent=11 // pred_fallthru
          _
      $region12: #{tpu_custom_call.1} parent=5 // pred_fallthru
        _
      %p518 = scmp.lt.s32.totalorder %s37, 2
      // Predicated region
      $region53: #{tpu_custom_call.1} parent=5 // pred_check
        %p519 = pneg %p518
      $region54: #{tpu_custom_call.1} parent=5 // pred_check_branch
        %521 = sbr.rel (%p519) target = $region56
      $region55: #{tpu_custom_call.1} parent=5 // pred_region
        // Predicated region
        $region57: #{tpu_custom_call.1} parent=55 // pred_check
          %p522 = pneg %p57
        $region58: #{tpu_custom_call.1} parent=55 // pred_check_branch
          %524 = sbr.rel (%p522) target = $region60
        $region59: #{tpu_custom_call.1} parent=55 // pred_region
          %p525 = scmp.lt.s32.totalorder %s37, 1
          %s526 = scalar_select %p525, %s37, 1
          %s527 = smul.addr %s526, 8
          %s528 = scalar_lea.vmem %s0, %s527
        $region60: #{tpu_custom_call.1} parent=55 // pred_fallthru
          _
        // Predicated region
        $region61: #{tpu_custom_call.1} parent=55 // pred_check
          %p529 = pneg %p83
        $region62: #{tpu_custom_call.1} parent=55 // pred_check_branch
          %531 = sbr.rel (%p529) target = $region64
        $region63: #{tpu_custom_call.1} parent=55 // pred_region
          %s532 = sand.u32 %s73, 1
          %s533 = scalar_lea.sflag [#allocation3], %s532
          %s534 = sand.u32 %s73, 1
          %s535 = smul.addr %s534, 8
          %s536 = scalar_lea.vmem [#allocation2], %s535
          %s538 = ssub.s32 128, 128
          %539 = vsyncadd %s533, %s538
          %s540 = smul.addr %s37, 128
          %s541 = scalar_lea.hbm %s1, %s540
          %s543 = sshll.u32 %s536, 4
          %s544 = int_to_ptr.vmem [resolvable:$true] %s543
          %546 = dma.hbm_to_vmem [thread:$0]  %s541, 128, %s544, %s533
        $region64: #{tpu_custom_call.1} parent=55 // pred_fallthru
          _
        // Predicated region
        $region65: #{tpu_custom_call.1} parent=55 // pred_check
          %p547 = pneg %p109
        $region66: #{tpu_custom_call.1} parent=55 // pred_check_branch
          %549 = sbr.rel (%p547) target = $region68
        $region67: #{tpu_custom_call.1} parent=55 // pred_region
          %s550 = sand.u32 %s37, 1
          %s551 = scalar_lea.sflag [#allocation6], %s550
          %s552 = sand.u32 %s99, 1
          %s553 = smul.addr %s552, 8
          %s554 = scalar_lea.vmem [#allocation5], %s553
          %s556 = ssub.s32 128, 128
          %557 = vsyncadd %s551, %s556
          %s558 = smul.addr %s37, 128
          %s559 = scalar_lea.hbm %s2, %s558
          %s561 = sshll.u32 %s554, 4
          %s562 = int_to_ptr.vmem [resolvable:$true] %s561
          %564 = dma.hbm_to_vmem [thread:$0]  %s559, 128, %s562, %s551
        $region68: #{tpu_custom_call.1} parent=55 // pred_fallthru
          _
        // Predicated region
        $region69: #{tpu_custom_call.1} parent=55 // pred_check
          %p565 = pneg %p135
        $region70: #{tpu_custom_call.1} parent=55 // pred_check_branch
          %567 = sbr.rel (%p565) target = $region72
        $region71: #{tpu_custom_call.1} parent=55 // pred_region
          %s568 = sand.u32 %s37, 1
          %s569 = scalar_lea.sflag [#allocation6], %s568
          %s570 = sand.u32 %s125, 1
          %s571 = smul.addr %s570, 32
          %s572 = scalar_lea.vmem [#allocation7], %s571
          %s574 = ssub.s32 512, 512
          %575 = vsyncadd %s569, %s574
          %s576 = smul.addr %s37, 4
          %s577 = smul.addr %s576, 128
          %s578 = scalar_lea.hbm %s3, %s577
          %s580 = sshll.u32 %s572, 4
          %s581 = int_to_ptr.vmem [resolvable:$true] %s580
          %583 = dma.hbm_to_vmem [thread:$0]  %s578, 512, %s581, %s569
        $region72: #{tpu_custom_call.1} parent=55 // pred_fallthru
          _
      $region56: #{tpu_custom_call.1} parent=5 // pred_fallthru
        _
      %p584 = scmp.le.s32.totalorder 1, %s37
      %p585 = scmp.lt.s32.totalorder %s37, 3
      %p586 = pnand %p584, %p585
      %p587 = pneg %p586
      // Predicated region
      $region73: #{tpu_custom_call.1} parent=5 // pred_check
        _
      $region74: #{tpu_custom_call.1} parent=5 // pred_check_branch
        %589 = sbr.rel (%p586) target = $region76
      $region75: #{tpu_custom_call.1} parent=5 // pred_region
        %s590 = ssub.s32 %s37, 1
        %s591 = sand.u32 %s76, 1
        %s592 = scalar_lea.sflag [#allocation3], %s591
        %s593 = sand.u32 %s76, 1
        %s594 = smul.addr %s593, 8
        %s595 = scalar_lea.vmem [#allocation2], %s594
        // Predicated region
        $region77: #{tpu_custom_call.1} parent=75 // pred_check
          %p596 = pneg %p89
        $region78: #{tpu_custom_call.1} parent=75 // pred_check_branch
          %598 = sbr.rel (%p596) target = $region80
        $region79: #{tpu_custom_call.1} parent=75 // pred_region
          %599 = dma.done %s592, 128
        $region80: #{tpu_custom_call.1} parent=75 // pred_fallthru
          _
        %s600 = sand.u32 %s42, 1
        %s601 = scalar_lea.sflag [#allocation6], %s600
        %s602 = sand.u32 %s102, 1
        %s603 = smul.addr %s602, 8
        %s604 = scalar_lea.vmem [#allocation5], %s603
        // Predicated region
        $region81: #{tpu_custom_call.1} parent=75 // pred_check
          %p605 = pneg %p115
        $region82: #{tpu_custom_call.1} parent=75 // pred_check_branch
          %607 = sbr.rel (%p605) target = $region84
        $region83: #{tpu_custom_call.1} parent=75 // pred_region
          %608 = dma.done %s601, 128
        $region84: #{tpu_custom_call.1} parent=75 // pred_fallthru
          _
        %s609 = sand.u32 %s42, 1
        %s610 = scalar_lea.sflag [#allocation6], %s609
        %s611 = sand.u32 %s128, 1
        %s612 = smul.addr %s611, 32
        %s613 = scalar_lea.vmem [#allocation7], %s612
        // Predicated region
        $region85: #{tpu_custom_call.1} parent=75 // pred_check
          %p614 = pneg %p141
        $region86: #{tpu_custom_call.1} parent=75 // pred_check_branch
          %616 = sbr.rel (%p614) target = $region88
        $region87: #{tpu_custom_call.1} parent=75 // pred_region
          %617 = dma.done %s610, 512
        $region88: #{tpu_custom_call.1} parent=75 // pred_fallthru
          _
        // Predicated region
        $region89: #{tpu_custom_call.1} parent=75 // pred_check
          %p618 = pneg %p204
        $region90: #{tpu_custom_call.1} parent=75 // pred_check_branch
          %620 = sbr.rel (%p618) target = $region92
        $region91: #{tpu_custom_call.1} parent=75 // pred_region
          %621 = dma.done [#allocation9], 384
        $region92: #{tpu_custom_call.1} parent=75 // pred_fallthru
          _
        // Predicated region
        $region93: #{tpu_custom_call.1} parent=75 // pred_check
          %p622 = pneg %p351
        $region94: #{tpu_custom_call.1} parent=75 // pred_check_branch
          %624 = sbr.rel (%p622) target = $region96
        $region95: #{tpu_custom_call.1} parent=75 // pred_region
          %625 = dma.done [#allocation9], 16
        $region96: #{tpu_custom_call.1} parent=75 // pred_fallthru
          _
        %p626 = scmp.lt.s32.totalorder %s42, 1
        %s627 = scalar_select %p626, %s42, 1
        %s628 = smul.addr %s627, 8
        %s629 = scalar_lea.vmem %s0, %s628
        %p630 = pneg %p63
        %p631 = pneg %p60
        %s632 = sand.u32 %s76, 1
        %s633 = scalar_lea.sflag [#allocation3], %s632
        %s634 = sand.u32 %s76, 1
        %s635 = smul.addr %s634, 8
        %s636 = scalar_lea.vmem [#allocation2], %s635
        %p637 = pneg %p89
        %p638 = pneg %p86
        %s639 = sand.u32 %s42, 1
        %s640 = scalar_lea.sflag [#allocation6], %s639
        %s641 = sand.u32 %s102, 1
        %s642 = smul.addr %s641, 8
        %s643 = scalar_lea.vmem [#allocation5], %s642
        %p644 = pneg %p115
        %p645 = pneg %p112
        %s646 = sand.u32 %s42, 1
        %s647 = scalar_lea.sflag [#allocation6], %s646
        %s648 = sand.u32 %s128, 1
        %s649 = smul.addr %s648, 32
        %s650 = scalar_lea.vmem [#allocation7], %s649
        %p651 = pneg %p141
        %p652 = pneg %p138
        %p653 = pneg %p162
        %p654 = pneg %p159
        %p655 = pneg %p183
        %p656 = pneg %p180
        %p657 = pneg %p204
        %p658 = pneg %p201
        %p659 = pneg %p225
        %p660 = pneg %p222
        %p661 = pneg %p246
        %p662 = pneg %p243
        %p663 = pneg %p267
        %p664 = pneg %p264
        %p665 = pneg %p288
        %p666 = pneg %p285
        %p667 = pneg %p309
        %p668 = pneg %p306
        %p669 = pneg %p330
        %p670 = pneg %p327
        %p671 = pneg %p351
        %p672 = pneg %p348
        %p673 = pneg %p377
        %p674 = pneg %p374
        %s675 = sand.u32 %s364, 1
        %s676 = scalar_lea.sflag [#allocation4], %s675
        %s677 = sand.u32 %s364, 1
        %s678 = smul.addr %s677, 8
        %s679 = scalar_lea.vmem [#allocation11], %s678
        %p680 = pneg %p403
        %p681 = pneg %p400
        %s682 = sand.u32 %s390, 1
        %s683 = scalar_lea.sflag [#allocation13], %s682
        %s684 = sand.u32 %s390, 1
        %s685 = smul.addr %s684, 8
        %s686 = scalar_lea.vmem [#allocation12], %s685
        %p687 = pneg %p429
        %p688 = pneg %p426
        %p689 = scmp.lt.s32.totalorder %s42, 1
        %s690 = scalar_select %p689, %s42, 1
        %s691 = smul.addr %s690, 8
        %s692 = scalar_lea.vmem %s16, %s691
        %p693 = pneg %p455
        %p694 = pneg %p452
        %p695 = scmp.lt.s32.totalorder %s42, 1
        %s696 = scalar_select %p695, %s42, 1
        %s697 = smul.addr %s696, 8
        %s698 = scalar_lea.vmem %s17, %s697
        %p699 = scmp.lt.s32.totalorder %s42, 1
        %s700 = scalar_select %p699, %s42, 1
        %s701 = smul.addr %s700, 8
        %s702 = scalar_lea.vmem %s0, %s701
        %p703 = scmp.lt.s32.totalorder %s42, 1
        %s704 = scalar_select %p703, %s42, 1
        %s705 = smul.addr %s704, 8
        %s706 = scalar_lea.vmem %s16, %s705
        %p707 = scmp.lt.s32.totalorder %s42, 1
        %s708 = scalar_select %p707, %s42, 1
        %s709 = smul.addr %s708, 8
        %s710 = scalar_lea.vmem %s17, %s709
        %v711 = vld [vmem:[%s702] sm:$0xff]
        %v712 = vld [vmem:[%s595] sm:$0xff]
        %v713 = vld [vmem:[%s604] sm:$0xff]
        %v714 = vld [vmem:[%s613] sm:$0xff]
        %v715 = vld [vmem:[%s613 + $0x8] sm:$0xff]
        %v716 = vld [vmem:[%s613 + $0x10] sm:$0xff]
        %v717 = vld [vmem:[%s613 + $0x18] sm:$0xff]
        %v718 = vld [vmem:[%s11] sm:$0x1]
        %v719 = vld [vmem:[%s12] sm:$0x1]
        %v720 = vld [vmem:[#allocation10] sm:$0x1]
        %v721 = vld [vmem:[%s4] sm:$0xff]
        %v722 = vld [vmem:[%s4 + $0x8] sm:$0xff]
        %v723 = vld [vmem:[%s4 + $0x10] sm:$0xff]
        %v724 = vld [vmem:[%s4 + $0x18] sm:$0xff]
        %v725 = vld [vmem:[%s4 + $0x20] sm:$0xff]
        %v726 = vld [vmem:[%s4 + $0x28] sm:$0xff]
        %v727 = vld [vmem:[%s4 + $0x30] sm:$0xff]
        %v728 = vld [vmem:[%s4 + $0x38] sm:$0xff]
        %v729 = vld [vmem:[%s4 + $0x40] sm:$0xff]
        %v730 = vld [vmem:[%s4 + $0x48] sm:$0xff]
        %v731 = vld [vmem:[%s4 + $0x50] sm:$0xff]
        %v732 = vld [vmem:[%s4 + $0x58] sm:$0xff]
        %v733 = vld [vmem:[%s4 + $0x60] sm:$0xff]
        %v734 = vld [vmem:[%s4 + $0x68] sm:$0xff]
        %v735 = vld [vmem:[%s4 + $0x70] sm:$0xff]
        %v736 = vld [vmem:[%s4 + $0x78] sm:$0xff]
        %737 = vmatprep.subr.mxu0 0.0
        %738 = vmatpush1.msra.mxu0 %v736
        %739 = vmatprep.subr.mxu0 0.0
        %740 = vmatpush1.msra.mxu0 %v735
        %741 = vmatprep.subr.mxu0 0.0
        %742 = vmatpush1.msra.mxu0 %v734
        %743 = vmatprep.subr.mxu0 0.0
        %744 = vmatpush1.msra.mxu0 %v733
        %745 = vmatprep.subr.mxu0 0.0
        %746 = vmatpush1.msra.mxu0 %v732
        %747 = vmatprep.subr.mxu0 0.0
        %748 = vmatpush1.msra.mxu0 %v731
        %749 = vmatprep.subr.mxu0 0.0
        %750 = vmatpush1.msra.mxu0 %v730
        %751 = vmatprep.subr.mxu0 0.0
        %752 = vmatpush1.msra.mxu0 %v729
        %753 = vmatprep.subr.mxu0 0.0
        %754 = vmatpush1.msra.mxu0 %v728
        %755 = vmatprep.subr.mxu0 0.0
        %756 = vmatpush1.msra.mxu0 %v727
        %757 = vmatprep.subr.mxu0 0.0
        %758 = vmatpush1.msra.mxu0 %v726
        %759 = vmatprep.subr.mxu0 0.0
        %760 = vmatpush1.msra.mxu0 %v725
        %761 = vmatprep.subr.mxu0 0.0
        %762 = vmatpush1.msra.mxu0 %v724
        %763 = vmatprep.subr.mxu0 0.0
        %764 = vmatpush1.msra.mxu0 %v723
        %765 = vmatprep.subr.mxu0 0.0
        %766 = vmatpush1.msra.mxu0 %v722
        %767 = vmatprep.subr.mxu0 0.0
        %768 = vmatpush1.msra.mxu0 %v721
        %769 = vmatprep.subr.mxu0 0.0
        %770 = vmatpush2.msra.mxu0 0.0
        %771 = vmatprep.subr.mxu0 0.0
        %772 = vmatpush2.msra.mxu0 0.0
        %773 = vmatprep.subr.mxu0 0.0
        %774 = vmatpush2.msra.mxu0 0.0
        %775 = vmatprep.subr.mxu0 0.0
        %776 = vmatpush2.msra.mxu0 0.0
        %777 = vmatprep.subr.mxu0 0.0
        %778 = vmatpush2.msra.mxu0 0.0
        %779 = vmatprep.subr.mxu0 0.0
        %780 = vmatpush2.msra.mxu0 0.0
        %781 = vmatprep.subr.mxu0 0.0
        %782 = vmatpush2.msra.mxu0 0.0
        %783 = vmatprep.subr.mxu0 0.0
        %784 = vmatpush2.msra.mxu0 0.0
        %785 = vmatprep.subr.mxu0 0.0
        %786 = vmatpush2.msra.mxu0 0.0
        %787 = vmatprep.subr.mxu0 0.0
        %788 = vmatpush2.msra.mxu0 0.0
        %789 = vmatprep.subr.mxu0 0.0
        %790 = vmatpush2.msra.mxu0 0.0
        %791 = vmatprep.subr.mxu0 0.0
        %792 = vmatpush2.msra.mxu0 0.0
        %793 = vmatprep.subr.mxu0 0.0
        %794 = vmatpush2.msra.mxu0 0.0
        %795 = vmatprep.subr.mxu0 0.0
        %796 = vmatpush2.msra.mxu0 0.0
        %797 = vmatprep.subr.mxu0 0.0
        %798 = vmatpush2.msra.mxu0 0.0
        %799 = vmatprep.subr.mxu0 0.0
        %800 = vmatpush2.msra.mxu0 0.0
        %801 = vmatprep.mubr.f32.mxu0 0.0
        %802 = vmatmul.mubr.f32.gmra.mxu0 %v712
        %v803 = vpop.f32.mrf.mxu0
        %v804 = vadd.f32 0.0, %v803
        %v805 = vpop.f32.mrf.mxu0
        %806 = vdwg.mxu0
        %v807 = vmul.f32 %v713, %v713
        %v808 = vld [vmem:[#allocation8] sm:$0xff]
        %v809 = vld [vmem:[#allocation8 + $0x8] sm:$0xff]
        %v810 = vld [vmem:[#allocation8 + $0x10] sm:$0xff]
        %vm811 = vcmask 195584
        %v813 = vsel %vm811, %v807, 0
        %815 = vmatprep.subr.mxu0 0.0
        %816 = vmatpush1.msra.mxu0 0.0
        %817 = vmatprep.subr.mxu0 0.0
        %818 = vmatpush1.msra.mxu0 0.0
        %819 = vmatprep.subr.mxu0 0.0
        %820 = vmatpush1.msra.mxu0 0.0
        %821 = vmatprep.subr.mxu0 0.0
        %822 = vmatpush1.msra.mxu0 0.0
        %823 = vmatprep.subr.mxu0 0.0
        %824 = vmatpush1.msra.mxu0 0.0
        %825 = vmatprep.subr.mxu0 0.0
        %826 = vmatpush1.msra.mxu0 0.0
        %827 = vmatprep.subr.mxu0 0.0
        %828 = vmatpush1.msra.mxu0 0.0
        %829 = vmatprep.subr.mxu0 0.0
        %830 = vmatpush1.msra.mxu0 0.0
        %831 = vmatprep.subr.mxu0 0.0
        %832 = vmatpush1.msra.mxu0 0.0
        %833 = vmatprep.subr.mxu0 0.0
        %834 = vmatpush1.msra.mxu0 0.0
        %835 = vmatprep.subr.mxu0 0.0
        %836 = vmatpush1.msra.mxu0 0.0
        %837 = vmatprep.subr.mxu0 0.0
        %838 = vmatpush1.msra.mxu0 0.0
        %839 = vmatprep.subr.mxu0 0.0
        %840 = vmatpush1.msra.mxu0 0.0
        %841 = vmatprep.subr.mxu0 0.0
        %842 = vmatpush1.msra.mxu0 %v810
        %843 = vmatprep.subr.mxu0 0.0
        %844 = vmatpush1.msra.mxu0 %v809
        %845 = vmatprep.subr.mxu0 0.0
        %846 = vmatpush1.msra.mxu0 %v808
        %847 = vmatprep.subr.mxu0 0.0
        %848 = vmatpush2.msra.mxu0 0.0
        %849 = vmatprep.subr.mxu0 0.0
        %850 = vmatpush2.msra.mxu0 0.0
        %851 = vmatprep.subr.mxu0 0.0
        %852 = vmatpush2.msra.mxu0 0.0
        %853 = vmatprep.subr.mxu0 0.0
        %854 = vmatpush2.msra.mxu0 0.0
        %855 = vmatprep.subr.mxu0 0.0
        %856 = vmatpush2.msra.mxu0 0.0
        %857 = vmatprep.subr.mxu0 0.0
        %858 = vmatpush2.msra.mxu0 0.0
        %859 = vmatprep.subr.mxu0 0.0
        %860 = vmatpush2.msra.mxu0 0.0
        %861 = vmatprep.subr.mxu0 0.0
        %862 = vmatpush2.msra.mxu0 0.0
        %863 = vmatprep.subr.mxu0 0.0
        %864 = vmatpush2.msra.mxu0 0.0
        %865 = vmatprep.subr.mxu0 0.0
        %866 = vmatpush2.msra.mxu0 0.0
        %867 = vmatprep.subr.mxu0 0.0
        %868 = vmatpush2.msra.mxu0 0.0
        %869 = vmatprep.subr.mxu0 0.0
        %870 = vmatpush2.msra.mxu0 0.0
        %871 = vmatprep.subr.mxu0 0.0
        %872 = vmatpush2.msra.mxu0 0.0
        %873 = vmatprep.subr.mxu0 0.0
        %874 = vmatpush2.msra.mxu0 0.0
        %875 = vmatprep.subr.mxu0 0.0
        %876 = vmatpush2.msra.mxu0 0.0
        %877 = vmatprep.subr.mxu0 0.0
        %878 = vmatpush2.msra.mxu0 0.0
        %879 = vmatprep.mubr.f32.mxu0 0.0
        %880 = vmatmul.mubr.f32.gmra.mxu0 %v813
        %v881 = vpop.f32.mrf.mxu0
        %v882 = vadd.f32 0.0, %v881
        %v883 = vpop.f32.mrf.mxu0
        %884 = vdwg.mxu0
        %v885 = vrsqrt.pop %v882
        %v886 = vmul.f32 %v882, %v885
        %vm887 = vcmp.eq.f32.partialorder %v882, inf
        %v888 = vsel %vm887, %v882, %v886
        %vm889 = vcmp.eq.f32.partialorder %v882, 0.0
        %v890 = vand.u32 %v882, 2147483648
        %v891 = vsel %vm889, %v890, %v888
        %v892 = vsub.f32 %v804, %v712
        %v893 = vsub.f32 1.0, %v718
        %v895 = vlaneseq
        %v896 = vshrl.u32 %v895, 7
        %v897 = vsub.s32 0, %v896
        %v898 = vrot.slane %v893, %v897
        %v900 = vmul.f32 %v892, %v898
        %v901 = vmul.f32 %v718, 1e+10
        %v903 = vlaneseq
        %v904 = vshrl.u32 %v903, 7
        %v905 = vsub.s32 0, %v904
        %v906 = vrot.slane %v901, %v905
        %v908 = vadd.f32 %v900, %v906
        %v909 = vmul.f32 %v908, %v891
        %v910 = vmax.f32 %v711, 0.0
        %v911 = vadd.f32 %v910, 0.0
        %v912 = vmul.f32 %v909, %v911
        %v913 = vsub.f32 0.0, %v912
        %v914 = vmul.f32 %v913, 1.442695
        %v915 = vpow.pop %v914
        %v916 = vsub.f32 1.0, %v915
        %v917 = vld [vmem:[%s5] sm:$0xff]
        %v918 = vld [vmem:[%s5 + $0x8] sm:$0xff]
        %v919 = vld [vmem:[%s5 + $0x10] sm:$0xff]
        %v920 = vld [vmem:[%s5 + $0x18] sm:$0xff]
        %v921 = vld [vmem:[%s5 + $0x20] sm:$0xff]
        %v922 = vld [vmem:[%s5 + $0x28] sm:$0xff]
        %v923 = vld [vmem:[%s5 + $0x30] sm:$0xff]
        %v924 = vld [vmem:[%s5 + $0x38] sm:$0xff]
        %v925 = vld [vmem:[%s5 + $0x40] sm:$0xff]
        %v926 = vld [vmem:[%s5 + $0x48] sm:$0xff]
        %v927 = vld [vmem:[%s5 + $0x50] sm:$0xff]
        %v928 = vld [vmem:[%s5 + $0x58] sm:$0xff]
        %v929 = vld [vmem:[%s5 + $0x60] sm:$0xff]
        %v930 = vld [vmem:[%s5 + $0x68] sm:$0xff]
        %v931 = vld [vmem:[%s5 + $0x70] sm:$0xff]
        %v932 = vld [vmem:[%s5 + $0x78] sm:$0xff]
        %933 = vmatprep.subr.mxu0 0.0
        %934 = vmatpush1.msra.mxu0 %v932
        %935 = vmatprep.subr.mxu0 0.0
        %936 = vmatpush1.msra.mxu0 %v931
        %937 = vmatprep.subr.mxu0 0.0
        %938 = vmatpush1.msra.mxu0 %v930
        %939 = vmatprep.subr.mxu0 0.0
        %940 = vmatpush1.msra.mxu0 %v929
        %941 = vmatprep.subr.mxu0 0.0
        %942 = vmatpush1.msra.mxu0 %v928
        %943 = vmatprep.subr.mxu0 0.0
        %944 = vmatpush1.msra.mxu0 %v927
        %945 = vmatprep.subr.mxu0 0.0
        %946 = vmatpush1.msra.mxu0 %v926
        %947 = vmatprep.subr.mxu0 0.0
        %948 = vmatpush1.msra.mxu0 %v925
        %949 = vmatprep.subr.mxu0 0.0
        %950 = vmatpush1.msra.mxu0 %v924
        %951 = vmatprep.subr.mxu0 0.0
        %952 = vmatpush1.msra.mxu0 %v923
        %953 = vmatprep.subr.mxu0 0.0
        %954 = vmatpush1.msra.mxu0 %v922
        %955 = vmatprep.subr.mxu0 0.0
        %956 = vmatpush1.msra.mxu0 %v921
        %957 = vmatprep.subr.mxu0 0.0
        %958 = vmatpush1.msra.mxu0 %v920
        %959 = vmatprep.subr.mxu0 0.0
        %960 = vmatpush1.msra.mxu0 %v919
        %961 = vmatprep.subr.mxu0 0.0
        %962 = vmatpush1.msra.mxu0 %v918
        %963 = vmatprep.subr.mxu0 0.0
        %964 = vmatpush1.msra.mxu0 %v917
        %965 = vmatprep.subr.mxu0 0.0
        %966 = vmatpush2.msra.mxu0 0.0
        %967 = vmatprep.subr.mxu0 0.0
        %968 = vmatpush2.msra.mxu0 0.0
        %969 = vmatprep.subr.mxu0 0.0
        %970 = vmatpush2.msra.mxu0 0.0
        %971 = vmatprep.subr.mxu0 0.0
        %972 = vmatpush2.msra.mxu0 0.0
        %973 = vmatprep.subr.mxu0 0.0
        %974 = vmatpush2.msra.mxu0 0.0
        %975 = vmatprep.subr.mxu0 0.0
        %976 = vmatpush2.msra.mxu0 0.0
        %977 = vmatprep.subr.mxu0 0.0
        %978 = vmatpush2.msra.mxu0 0.0
        %979 = vmatprep.subr.mxu0 0.0
        %980 = vmatpush2.msra.mxu0 0.0
        %981 = vmatprep.subr.mxu0 0.0
        %982 = vmatpush2.msra.mxu0 0.0
        %983 = vmatprep.subr.mxu0 0.0
        %984 = vmatpush2.msra.mxu0 0.0
        %985 = vmatprep.subr.mxu0 0.0
        %986 = vmatpush2.msra.mxu0 0.0
        %987 = vmatprep.subr.mxu0 0.0
        %988 = vmatpush2.msra.mxu0 0.0
        %989 = vmatprep.subr.mxu0 0.0
        %990 = vmatpush2.msra.mxu0 0.0
        %991 = vmatprep.subr.mxu0 0.0
        %992 = vmatpush2.msra.mxu0 0.0
        %993 = vmatprep.subr.mxu0 0.0
        %994 = vmatpush2.msra.mxu0 0.0
        %995 = vmatprep.subr.mxu0 0.0
        %996 = vmatpush2.msra.mxu0 0.0
        %997 = vmatprep.mubr.f32.mxu0 0.0
        %998 = vmatmul.mubr.f32.gmra.mxu0 %v912
        %v999 = vpop.f32.mrf.mxu0
        %v1000 = vadd.f32 0.0, %v999
        %v1001 = vpop.f32.mrf.mxu0
        %1002 = vdwg.mxu0
        %v1003 = vsub.f32 1.0, %v719
        %v1004 = vsub.f32 0.0, %v1000
        %v1005 = vmul.f32 %v1004, 1.442695
        %v1006 = vpow.pop %v1005
        %v1007 = vsub.f32 1.0, %v1006
        %v1008 = vsub.f32 1.0, %v1007
        %v1010 = vlaneseq
        %v1011 = vshrl.u32 %v1010, 7
        %v1012 = vsub.s32 0, %v1011
        %v1013 = vrot.slane %v1003, %v1012
        %v1015 = vmul.f32 %v1013, %v1008
        %v1017 = vlaneseq
        %v1018 = vshrl.u32 %v1017, 7
        %v1019 = vsub.s32 0, %v1018
        %v1020 = vrot.slane %v719, %v1019
        %v1022 = vadd.f32 %v1020, %v1015
        %v1023 = vmul.f32 %v916, %v1022
        %1024 = vst [vmem:[%s679] sm:$0xff] %v1023
        %v1025 = vld [vmem:[%s9] sm:$0xff]
        %v1026 = vld [vmem:[%s9 + $0x8] sm:$0xff]
        %v1027 = vld [vmem:[%s9 + $0x10] sm:$0xff]
        %v1028 = vld [vmem:[%s9 + $0x18] sm:$0xff]
        %v1029 = vld [vmem:[%s9 + $0x20] sm:$0xff]
        %v1030 = vld [vmem:[%s9 + $0x28] sm:$0xff]
        %v1031 = vld [vmem:[%s9 + $0x30] sm:$0xff]
        %v1032 = vld [vmem:[%s9 + $0x38] sm:$0xff]
        %v1033 = vld [vmem:[%s9 + $0x40] sm:$0xff]
        %v1034 = vld [vmem:[%s9 + $0x48] sm:$0xff]
        %v1035 = vld [vmem:[%s9 + $0x50] sm:$0xff]
        %v1036 = vld [vmem:[%s9 + $0x58] sm:$0xff]
        %v1037 = vld [vmem:[%s9 + $0x60] sm:$0xff]
        %v1038 = vld [vmem:[%s9 + $0x68] sm:$0xff]
        %v1039 = vld [vmem:[%s9 + $0x70] sm:$0xff]
        %v1040 = vld [vmem:[%s9 + $0x78] sm:$0xff]
        %1041 = vmatprep.subr.mxu0 0.0
        %1042 = vmatpush1.msra.mxu0 %v1040
        %1043 = vmatprep.subr.mxu0 0.0
        %1044 = vmatpush1.msra.mxu0 %v1039
        %1045 = vmatprep.subr.mxu0 0.0
        %1046 = vmatpush1.msra.mxu0 %v1038
        %1047 = vmatprep.subr.mxu0 0.0
        %1048 = vmatpush1.msra.mxu0 %v1037
        %1049 = vmatprep.subr.mxu0 0.0
        %1050 = vmatpush1.msra.mxu0 %v1036
        %1051 = vmatprep.subr.mxu0 0.0
        %1052 = vmatpush1.msra.mxu0 %v1035
        %1053 = vmatprep.subr.mxu0 0.0
        %1054 = vmatpush1.msra.mxu0 %v1034
        %1055 = vmatprep.subr.mxu0 0.0
        %1056 = vmatpush1.msra.mxu0 %v1033
        %1057 = vmatprep.subr.mxu0 0.0
        %1058 = vmatpush1.msra.mxu0 %v1032
        %1059 = vmatprep.subr.mxu0 0.0
        %1060 = vmatpush1.msra.mxu0 %v1031
        %1061 = vmatprep.subr.mxu0 0.0
        %1062 = vmatpush1.msra.mxu0 %v1030
        %1063 = vmatprep.subr.mxu0 0.0
        %1064 = vmatpush1.msra.mxu0 %v1029
        %1065 = vmatprep.subr.mxu0 0.0
        %1066 = vmatpush1.msra.mxu0 %v1028
        %1067 = vmatprep.subr.mxu0 0.0
        %1068 = vmatpush1.msra.mxu0 %v1027
        %1069 = vmatprep.subr.mxu0 0.0
        %1070 = vmatpush1.msra.mxu0 %v1026
        %1071 = vmatprep.subr.mxu0 0.0
        %1072 = vmatpush1.msra.mxu0 %v1025
        %1073 = vmatprep.subr.mxu0 0.0
        %1074 = vmatpush2.msra.mxu0 0.0
        %1075 = vmatprep.subr.mxu0 0.0
        %1076 = vmatpush2.msra.mxu0 0.0
        %1077 = vmatprep.subr.mxu0 0.0
        %1078 = vmatpush2.msra.mxu0 0.0
        %1079 = vmatprep.subr.mxu0 0.0
        %1080 = vmatpush2.msra.mxu0 0.0
        %1081 = vmatprep.subr.mxu0 0.0
        %1082 = vmatpush2.msra.mxu0 0.0
        %1083 = vmatprep.subr.mxu0 0.0
        %1084 = vmatpush2.msra.mxu0 0.0
        %1085 = vmatprep.subr.mxu0 0.0
        %1086 = vmatpush2.msra.mxu0 0.0
        %1087 = vmatprep.subr.mxu0 0.0
        %1088 = vmatpush2.msra.mxu0 0.0
        %1089 = vmatprep.subr.mxu0 0.0
        %1090 = vmatpush2.msra.mxu0 0.0
        %1091 = vmatprep.subr.mxu0 0.0
        %1092 = vmatpush2.msra.mxu0 0.0
        %1093 = vmatprep.subr.mxu0 0.0
        %1094 = vmatpush2.msra.mxu0 0.0
        %1095 = vmatprep.subr.mxu0 0.0
        %1096 = vmatpush2.msra.mxu0 0.0
        %1097 = vmatprep.subr.mxu0 0.0
        %1098 = vmatpush2.msra.mxu0 0.0
        %1099 = vmatprep.subr.mxu0 0.0
        %1100 = vmatpush2.msra.mxu0 0.0
        %1101 = vmatprep.subr.mxu0 0.0
        %1102 = vmatpush2.msra.mxu0 0.0
        %1103 = vmatprep.subr.mxu0 0.0
        %1104 = vmatpush2.msra.mxu0 0.0
        %1105 = vmatprep.mubr.f32.mxu0 0.0
        %1106 = vmatmul.mubr.f32.gmra.mxu0 %v912
        %v1107 = vpop.f32.mrf.mxu0
        %v1108 = vadd.f32 0.0, %v1107
        %v1109 = vpop.f32.mrf.mxu0
        %1110 = vdwg.mxu0
        %v1111 = vsub.f32 0.0, %v1108
        %v1112 = vmul.f32 %v1111, 1.442695
        %v1113 = vpow.pop %v1112
        %v1114 = vsub.f32 1.0, %v1113
        %vm1115 = vcmask 64512
        %1116 = vst.msk [vmem:[%s710] sm:$0xff] %vm1115, %v1114
        %v1117 = vmul.f32 %v1023, %v712
        %1118 = vmatprep.subr.mxu0 0.0
        %1119 = vmatpush1.msra.mxu0 %v1040
        %1120 = vmatprep.subr.mxu0 0.0
        %1121 = vmatpush1.msra.mxu0 %v1039
        %1122 = vmatprep.subr.mxu0 0.0
        %1123 = vmatpush1.msra.mxu0 %v1038
        %1124 = vmatprep.subr.mxu0 0.0
        %1125 = vmatpush1.msra.mxu0 %v1037
        %1126 = vmatprep.subr.mxu0 0.0
        %1127 = vmatpush1.msra.mxu0 %v1036
        %1128 = vmatprep.subr.mxu0 0.0
        %1129 = vmatpush1.msra.mxu0 %v1035
        %1130 = vmatprep.subr.mxu0 0.0
        %1131 = vmatpush1.msra.mxu0 %v1034
        %1132 = vmatprep.subr.mxu0 0.0
        %1133 = vmatpush1.msra.mxu0 %v1033
        %1134 = vmatprep.subr.mxu0 0.0
        %1135 = vmatpush1.msra.mxu0 %v1032
        %1136 = vmatprep.subr.mxu0 0.0
        %1137 = vmatpush1.msra.mxu0 %v1031
        %1138 = vmatprep.subr.mxu0 0.0
        %1139 = vmatpush1.msra.mxu0 %v1030
        %1140 = vmatprep.subr.mxu0 0.0
        %1141 = vmatpush1.msra.mxu0 %v1029
        %1142 = vmatprep.subr.mxu0 0.0
        %1143 = vmatpush1.msra.mxu0 %v1028
        %1144 = vmatprep.subr.mxu0 0.0
        %1145 = vmatpush1.msra.mxu0 %v1027
        %1146 = vmatprep.subr.mxu0 0.0
        %1147 = vmatpush1.msra.mxu0 %v1026
        %1148 = vmatprep.subr.mxu0 0.0
        %1149 = vmatpush1.msra.mxu0 %v1025
        %1150 = vmatprep.subr.mxu0 0.0
        %1151 = vmatpush2.msra.mxu0 0.0
        %1152 = vmatprep.subr.mxu0 0.0
        %1153 = vmatpush2.msra.mxu0 0.0
        %1154 = vmatprep.subr.mxu0 0.0
        %1155 = vmatpush2.msra.mxu0 0.0
        %1156 = vmatprep.subr.mxu0 0.0
        %1157 = vmatpush2.msra.mxu0 0.0
        %1158 = vmatprep.subr.mxu0 0.0
        %1159 = vmatpush2.msra.mxu0 0.0
        %1160 = vmatprep.subr.mxu0 0.0
        %1161 = vmatpush2.msra.mxu0 0.0
        %1162 = vmatprep.subr.mxu0 0.0
        %1163 = vmatpush2.msra.mxu0 0.0
        %1164 = vmatprep.subr.mxu0 0.0
        %1165 = vmatpush2.msra.mxu0 0.0
        %1166 = vmatprep.subr.mxu0 0.0
        %1167 = vmatpush2.msra.mxu0 0.0
        %1168 = vmatprep.subr.mxu0 0.0
        %1169 = vmatpush2.msra.mxu0 0.0
        %1170 = vmatprep.subr.mxu0 0.0
        %1171 = vmatpush2.msra.mxu0 0.0
        %1172 = vmatprep.subr.mxu0 0.0
        %1173 = vmatpush2.msra.mxu0 0.0
        %1174 = vmatprep.subr.mxu0 0.0
        %1175 = vmatpush2.msra.mxu0 0.0
        %1176 = vmatprep.subr.mxu0 0.0
        %1177 = vmatpush2.msra.mxu0 0.0
        %1178 = vmatprep.subr.mxu0 0.0
        %1179 = vmatpush2.msra.mxu0 0.0
        %1180 = vmatprep.subr.mxu0 0.0
        %1181 = vmatpush2.msra.mxu0 0.0
        %1182 = vmatprep.mubr.f32.mxu0 0.0
        %1183 = vmatmul.mubr.f32.gmra.mxu0 %v1117
        %v1184 = vpop.f32.mrf.mxu0
        %v1185 = vadd.f32 0.0, %v1184
        %v1186 = vpop.f32.mrf.mxu0
        %1187 = vdwg.mxu0
        %1188 = vst.msk [vmem:[%s706] sm:$0xff] %vm1115, %v1185
        %v1189 = vld [vmem:[%s7] sm:$0xff]
        %v1190 = vld [vmem:[%s7 + $0x8] sm:$0xff]
        %v1191 = vld [vmem:[%s7 + $0x10] sm:$0xff]
        %v1192 = vld [vmem:[%s7 + $0x18] sm:$0xff]
        %v1193 = vld [vmem:[%s7 + $0x20] sm:$0xff]
        %v1194 = vld [vmem:[%s7 + $0x28] sm:$0xff]
        %v1195 = vld [vmem:[%s7 + $0x30] sm:$0xff]
        %v1196 = vld [vmem:[%s7 + $0x38] sm:$0xff]
        %v1197 = vld [vmem:[%s7 + $0x40] sm:$0xff]
        %v1198 = vld [vmem:[%s7 + $0x48] sm:$0xff]
        %v1199 = vld [vmem:[%s7 + $0x50] sm:$0xff]
        %v1200 = vld [vmem:[%s7 + $0x58] sm:$0xff]
        %v1201 = vld [vmem:[%s7 + $0x60] sm:$0xff]
        %v1202 = vld [vmem:[%s7 + $0x68] sm:$0xff]
        %v1203 = vld [vmem:[%s7 + $0x70] sm:$0xff]
        %v1204 = vld [vmem:[%s7 + $0x78] sm:$0xff]
        %v1205 = vld [vmem:[%s7 + $0x80] sm:$0xff]
        %v1206 = vld [vmem:[%s7 + $0x88] sm:$0xff]
        %v1207 = vld [vmem:[%s7 + $0x90] sm:$0xff]
        %v1208 = vld [vmem:[%s7 + $0x98] sm:$0xff]
        %v1209 = vld [vmem:[%s7 + $0xa0] sm:$0xff]
        %v1210 = vld [vmem:[%s7 + $0xa8] sm:$0xff]
        %v1211 = vld [vmem:[%s7 + $0xb0] sm:$0xff]
        %v1212 = vld [vmem:[%s7 + $0xb8] sm:$0xff]
        %v1213 = vld [vmem:[%s7 + $0xc0] sm:$0xff]
        %v1214 = vld [vmem:[%s7 + $0xc8] sm:$0xff]
        %v1215 = vld [vmem:[%s7 + $0xd0] sm:$0xff]
        %v1216 = vld [vmem:[%s7 + $0xd8] sm:$0xff]
        %v1217 = vld [vmem:[%s7 + $0xe0] sm:$0xff]
        %v1218 = vld [vmem:[%s7 + $0xe8] sm:$0xff]
        %v1219 = vld [vmem:[%s7 + $0xf0] sm:$0xff]
        %v1220 = vld [vmem:[%s7 + $0xf8] sm:$0xff]
        %v1221 = vld [vmem:[%s7 + $0x100] sm:$0xff]
        %v1222 = vld [vmem:[%s7 + $0x108] sm:$0xff]
        %v1223 = vld [vmem:[%s7 + $0x110] sm:$0xff]
        %v1224 = vld [vmem:[%s7 + $0x118] sm:$0xff]
        %v1225 = vld [vmem:[%s7 + $0x120] sm:$0xff]
        %v1226 = vld [vmem:[%s7 + $0x128] sm:$0xff]
        %v1227 = vld [vmem:[%s7 + $0x130] sm:$0xff]
        %v1228 = vld [vmem:[%s7 + $0x138] sm:$0xff]
        %v1229 = vld [vmem:[%s7 + $0x140] sm:$0xff]
        %v1230 = vld [vmem:[%s7 + $0x148] sm:$0xff]
        %v1231 = vld [vmem:[%s7 + $0x150] sm:$0xff]
        %v1232 = vld [vmem:[%s7 + $0x158] sm:$0xff]
        %v1233 = vld [vmem:[%s7 + $0x160] sm:$0xff]
        %v1234 = vld [vmem:[%s7 + $0x168] sm:$0xff]
        %v1235 = vld [vmem:[%s7 + $0x170] sm:$0xff]
        %v1236 = vld [vmem:[%s7 + $0x178] sm:$0xff]
        %v1237 = vld [vmem:[%s7 + $0x180] sm:$0xff]
        %v1238 = vld [vmem:[%s7 + $0x188] sm:$0xff]
        %v1239 = vld [vmem:[%s7 + $0x190] sm:$0xff]
        %v1240 = vld [vmem:[%s7 + $0x198] sm:$0xff]
        %v1241 = vld [vmem:[%s7 + $0x1a0] sm:$0xff]
        %v1242 = vld [vmem:[%s7 + $0x1a8] sm:$0xff]
        %v1243 = vld [vmem:[%s7 + $0x1b0] sm:$0xff]
        %v1244 = vld [vmem:[%s7 + $0x1b8] sm:$0xff]
        %v1245 = vld [vmem:[%s7 + $0x1c0] sm:$0xff]
        %v1246 = vld [vmem:[%s7 + $0x1c8] sm:$0xff]
        %v1247 = vld [vmem:[%s7 + $0x1d0] sm:$0xff]
        %v1248 = vld [vmem:[%s7 + $0x1d8] sm:$0xff]
        %v1249 = vld [vmem:[%s7 + $0x1e0] sm:$0xff]
        %v1250 = vld [vmem:[%s7 + $0x1e8] sm:$0xff]
        %v1251 = vld [vmem:[%s7 + $0x1f0] sm:$0xff]
        %v1252 = vld [vmem:[%s7 + $0x1f8] sm:$0xff]
        %1253 = vmatprep.subr.mxu0 %v1250
        %1254 = vmatpush1.msra.mxu0 %v1249
        %1255 = vmatprep.subr.mxu0 %v1246
        %1256 = vmatpush1.msra.mxu0 %v1245
        %1257 = vmatprep.subr.mxu0 %v1242
        %1258 = vmatpush1.msra.mxu0 %v1241
        %1259 = vmatprep.subr.mxu0 %v1238
        %1260 = vmatpush1.msra.mxu0 %v1237
        %1261 = vmatprep.subr.mxu0 %v1234
        %1262 = vmatpush1.msra.mxu0 %v1233
        %1263 = vmatprep.subr.mxu0 %v1230
        %1264 = vmatpush1.msra.mxu0 %v1229
        %1265 = vmatprep.subr.mxu0 %v1226
        %1266 = vmatpush1.msra.mxu0 %v1225
        %1267 = vmatprep.subr.mxu0 %v1222
        %1268 = vmatpush1.msra.mxu0 %v1221
        %1269 = vmatprep.subr.mxu0 %v1218
        %1270 = vmatpush1.msra.mxu0 %v1217
        %1271 = vmatprep.subr.mxu0 %v1214
        %1272 = vmatpush1.msra.mxu0 %v1213
        %1273 = vmatprep.subr.mxu0 %v1210
        %1274 = vmatpush1.msra.mxu0 %v1209
        %1275 = vmatprep.subr.mxu0 %v1206
        %1276 = vmatpush1.msra.mxu0 %v1205
        %1277 = vmatprep.subr.mxu0 %v1202
        %1278 = vmatpush1.msra.mxu0 %v1201
        %1279 = vmatprep.subr.mxu0 %v1198
        %1280 = vmatpush1.msra.mxu0 %v1197
        %1281 = vmatprep.subr.mxu0 %v1194
        %1282 = vmatpush1.msra.mxu0 %v1193
        %1283 = vmatprep.subr.mxu0 %v1190
        %1284 = vmatpush1.msra.mxu0 %v1189
        %1285 = vmatprep.subr.mxu0 0.0
        %1286 = vmatpush2.msra.mxu0 0.0
        %1287 = vmatprep.subr.mxu0 0.0
        %1288 = vmatpush2.msra.mxu0 0.0
        %1289 = vmatprep.subr.mxu0 0.0
        %1290 = vmatpush2.msra.mxu0 0.0
        %1291 = vmatprep.subr.mxu0 0.0
        %1292 = vmatpush2.msra.mxu0 0.0
        %1293 = vmatprep.subr.mxu0 0.0
        %1294 = vmatpush2.msra.mxu0 0.0
        %1295 = vmatprep.subr.mxu0 0.0
        %1296 = vmatpush2.msra.mxu0 0.0
        %1297 = vmatprep.subr.mxu0 0.0
        %1298 = vmatpush2.msra.mxu0 0.0
        %1299 = vmatprep.subr.mxu0 0.0
        %1300 = vmatpush2.msra.mxu0 0.0
        %1301 = vmatprep.subr.mxu0 0.0
        %1302 = vmatpush2.msra.mxu0 0.0
        %1303 = vmatprep.subr.mxu0 0.0
        %1304 = vmatpush2.msra.mxu0 0.0
        %1305 = vmatprep.subr.mxu0 0.0
        %1306 = vmatpush2.msra.mxu0 0.0
        %1307 = vmatprep.subr.mxu0 0.0
        %1308 = vmatpush2.msra.mxu0 0.0
        %1309 = vmatprep.subr.mxu0 0.0
        %1310 = vmatpush2.msra.mxu0 0.0
        %1311 = vmatprep.subr.mxu0 0.0
        %1312 = vmatpush2.msra.mxu0 0.0
        %1313 = vmatprep.subr.mxu0 0.0
        %1314 = vmatpush2.msra.mxu0 0.0
        %1315 = vmatprep.subr.mxu0 0.0
        %1316 = vmatpush2.msra.mxu0 0.0
        %1317 = vmatprep.mubr.f32.mxu0 0.0
        %1318 = vmatmul.mubr.f32.gmra.mxu0 %v1023
        %v1319 = vpop.f32.mrf.mxu0
        %v1320 = vadd.f32 0.0, %v1319
        %v1321 = vpop.f32.mrf.mxu0
        %v1322 = vadd.f32 0.0, %v1321
        %1323 = vdwg.mxu0
        %1324 = vmatprep.subr.mxu0 %v1252
        %1325 = vmatpush1.msra.mxu0 %v1251
        %1326 = vmatprep.subr.mxu0 %v1248
        %1327 = vmatpush1.msra.mxu0 %v1247
        %1328 = vmatprep.subr.mxu0 %v1244
        %1329 = vmatpush1.msra.mxu0 %v1243
        %1330 = vmatprep.subr.mxu0 %v1240
        %1331 = vmatpush1.msra.mxu0 %v1239
        %1332 = vmatprep.subr.mxu0 %v1236
        %1333 = vmatpush1.msra.mxu0 %v1235
        %1334 = vmatprep.subr.mxu0 %v1232
        %1335 = vmatpush1.msra.mxu0 %v1231
        %1336 = vmatprep.subr.mxu0 %v1228
        %1337 = vmatpush1.msra.mxu0 %v1227
        %1338 = vmatprep.subr.mxu0 %v1224
        %1339 = vmatpush1.msra.mxu0 %v1223
        %1340 = vmatprep.subr.mxu0 %v1220
        %1341 = vmatpush1.msra.mxu0 %v1219
        %1342 = vmatprep.subr.mxu0 %v1216
        %1343 = vmatpush1.msra.mxu0 %v1215
        %1344 = vmatprep.subr.mxu0 %v1212
        %1345 = vmatpush1.msra.mxu0 %v1211
        %1346 = vmatprep.subr.mxu0 %v1208
        %1347 = vmatpush1.msra.mxu0 %v1207
        %1348 = vmatprep.subr.mxu0 %v1204
        %1349 = vmatpush1.msra.mxu0 %v1203
        %1350 = vmatprep.subr.mxu0 %v1200
        %1351 = vmatpush1.msra.mxu0 %v1199
        %1352 = vmatprep.subr.mxu0 %v1196
        %1353 = vmatpush1.msra.mxu0 %v1195
        %1354 = vmatprep.subr.mxu0 %v1192
        %1355 = vmatpush1.msra.mxu0 %v1191
        %1356 = vmatprep.subr.mxu0 0.0
        %1357 = vmatpush2.msra.mxu0 0.0
        %1358 = vmatprep.subr.mxu0 0.0
        %1359 = vmatpush2.msra.mxu0 0.0
        %1360 = vmatprep.subr.mxu0 0.0
        %1361 = vmatpush2.msra.mxu0 0.0
        %1362 = vmatprep.subr.mxu0 0.0
        %1363 = vmatpush2.msra.mxu0 0.0
        %1364 = vmatprep.subr.mxu0 0.0
        %1365 = vmatpush2.msra.mxu0 0.0
        %1366 = vmatprep.subr.mxu0 0.0
        %1367 = vmatpush2.msra.mxu0 0.0
        %1368 = vmatprep.subr.mxu0 0.0
        %1369 = vmatpush2.msra.mxu0 0.0
        %1370 = vmatprep.subr.mxu0 0.0
        %1371 = vmatpush2.msra.mxu0 0.0
        %1372 = vmatprep.subr.mxu0 0.0
        %1373 = vmatpush2.msra.mxu0 0.0
        %1374 = vmatprep.subr.mxu0 0.0
        %1375 = vmatpush2.msra.mxu0 0.0
        %1376 = vmatprep.subr.mxu0 0.0
        %1377 = vmatpush2.msra.mxu0 0.0
        %1378 = vmatprep.subr.mxu0 0.0
        %1379 = vmatpush2.msra.mxu0 0.0
        %1380 = vmatprep.subr.mxu0 0.0
        %1381 = vmatpush2.msra.mxu0 0.0
        %1382 = vmatprep.subr.mxu0 0.0
        %1383 = vmatpush2.msra.mxu0 0.0
        %1384 = vmatprep.subr.mxu0 0.0
        %1385 = vmatpush2.msra.mxu0 0.0
        %1386 = vmatprep.subr.mxu0 0.0
        %1387 = vmatpush2.msra.mxu0 0.0
        %1388 = vmatprep.mubr.f32.mxu0 0.0
        %1389 = vmatmul.mubr.f32.gmra.mxu0 %v1023
        %v1390 = vpop.f32.mrf.mxu0
        %v1391 = vadd.f32 0.0, %v1390
        %v1392 = vpop.f32.mrf.mxu0
        %v1393 = vadd.f32 0.0, %v1392
        %1394 = vdwg.mxu0
        %v1395 = vmul.f32 %v1320, %v714
        %v1396 = vmul.f32 %v1322, %v715
        %v1397 = vmul.f32 %v1391, %v716
        %v1398 = vmul.f32 %v1393, %v717
        %v1399 = vld [vmem:[%s8] sm:$0xff]
        %v1400 = vld [vmem:[%s8 + $0x8] sm:$0xff]
        %v1401 = vld [vmem:[%s8 + $0x10] sm:$0xff]
        %v1402 = vld [vmem:[%s8 + $0x18] sm:$0xff]
        %v1403 = vld [vmem:[%s8 + $0x20] sm:$0xff]
        %v1404 = vld [vmem:[%s8 + $0x28] sm:$0xff]
        %v1405 = vld [vmem:[%s8 + $0x30] sm:$0xff]
        %v1406 = vld [vmem:[%s8 + $0x38] sm:$0xff]
        %v1407 = vld [vmem:[%s8 + $0x40] sm:$0xff]
        %v1408 = vld [vmem:[%s8 + $0x48] sm:$0xff]
        %v1409 = vld [vmem:[%s8 + $0x50] sm:$0xff]
        %v1410 = vld [vmem:[%s8 + $0x58] sm:$0xff]
        %v1411 = vld [vmem:[%s8 + $0x60] sm:$0xff]
        %v1412 = vld [vmem:[%s8 + $0x68] sm:$0xff]
        %v1413 = vld [vmem:[%s8 + $0x70] sm:$0xff]
        %v1414 = vld [vmem:[%s8 + $0x78] sm:$0xff]
        %v1415 = vld [vmem:[%s8 + $0x80] sm:$0xff]
        %v1416 = vld [vmem:[%s8 + $0x88] sm:$0xff]
        %v1417 = vld [vmem:[%s8 + $0x90] sm:$0xff]
        %v1418 = vld [vmem:[%s8 + $0x98] sm:$0xff]
        %v1419 = vld [vmem:[%s8 + $0xa0] sm:$0xff]
        %v1420 = vld [vmem:[%s8 + $0xa8] sm:$0xff]
        %v1421 = vld [vmem:[%s8 + $0xb0] sm:$0xff]
        %v1422 = vld [vmem:[%s8 + $0xb8] sm:$0xff]
        %v1423 = vld [vmem:[%s8 + $0xc0] sm:$0xff]
        %v1424 = vld [vmem:[%s8 + $0xc8] sm:$0xff]
        %v1425 = vld [vmem:[%s8 + $0xd0] sm:$0xff]
        %v1426 = vld [vmem:[%s8 + $0xd8] sm:$0xff]
        %v1427 = vld [vmem:[%s8 + $0xe0] sm:$0xff]
        %v1428 = vld [vmem:[%s8 + $0xe8] sm:$0xff]
        %v1429 = vld [vmem:[%s8 + $0xf0] sm:$0xff]
        %v1430 = vld [vmem:[%s8 + $0xf8] sm:$0xff]
        %v1431 = vld [vmem:[%s8 + $0x100] sm:$0xff]
        %v1432 = vld [vmem:[%s8 + $0x108] sm:$0xff]
        %v1433 = vld [vmem:[%s8 + $0x110] sm:$0xff]
        %v1434 = vld [vmem:[%s8 + $0x118] sm:$0xff]
        %v1435 = vld [vmem:[%s8 + $0x120] sm:$0xff]
        %v1436 = vld [vmem:[%s8 + $0x128] sm:$0xff]
        %v1437 = vld [vmem:[%s8 + $0x130] sm:$0xff]
        %v1438 = vld [vmem:[%s8 + $0x138] sm:$0xff]
        %v1439 = vld [vmem:[%s8 + $0x140] sm:$0xff]
        %v1440 = vld [vmem:[%s8 + $0x148] sm:$0xff]
        %v1441 = vld [vmem:[%s8 + $0x150] sm:$0xff]
        %v1442 = vld [vmem:[%s8 + $0x158] sm:$0xff]
        %v1443 = vld [vmem:[%s8 + $0x160] sm:$0xff]
        %v1444 = vld [vmem:[%s8 + $0x168] sm:$0xff]
        %v1445 = vld [vmem:[%s8 + $0x170] sm:$0xff]
        %v1446 = vld [vmem:[%s8 + $0x178] sm:$0xff]
        %v1447 = vld [vmem:[%s8 + $0x180] sm:$0xff]
        %v1448 = vld [vmem:[%s8 + $0x188] sm:$0xff]
        %v1449 = vld [vmem:[%s8 + $0x190] sm:$0xff]
        %v1450 = vld [vmem:[%s8 + $0x198] sm:$0xff]
        %v1451 = vld [vmem:[%s8 + $0x1a0] sm:$0xff]
        %v1452 = vld [vmem:[%s8 + $0x1a8] sm:$0xff]
        %v1453 = vld [vmem:[%s8 + $0x1b0] sm:$0xff]
        %v1454 = vld [vmem:[%s8 + $0x1b8] sm:$0xff]
        %v1455 = vld [vmem:[%s8 + $0x1c0] sm:$0xff]
        %v1456 = vld [vmem:[%s8 + $0x1c8] sm:$0xff]
        %v1457 = vld [vmem:[%s8 + $0x1d0] sm:$0xff]
        %v1458 = vld [vmem:[%s8 + $0x1d8] sm:$0xff]
        %v1459 = vld [vmem:[%s8 + $0x1e0] sm:$0xff]
        %v1460 = vld [vmem:[%s8 + $0x1e8] sm:$0xff]
        %v1461 = vld [vmem:[%s8 + $0x1f0] sm:$0xff]
        %v1462 = vld [vmem:[%s8 + $0x1f8] sm:$0xff]
        %1463 = vmatprep.subr.mxu0 0.0
        %1464 = vmatpush1.msra.mxu0 %v1414
        %1465 = vmatprep.subr.mxu0 0.0
        %1466 = vmatpush1.msra.mxu0 %v1413
        %1467 = vmatprep.subr.mxu0 0.0
        %1468 = vmatpush1.msra.mxu0 %v1412
        %1469 = vmatprep.subr.mxu0 0.0
        %1470 = vmatpush1.msra.mxu0 %v1411
        %1471 = vmatprep.subr.mxu0 0.0
        %1472 = vmatpush1.msra.mxu0 %v1410
        %1473 = vmatprep.subr.mxu0 0.0
        %1474 = vmatpush1.msra.mxu0 %v1409
        %1475 = vmatprep.subr.mxu0 0.0
        %1476 = vmatpush1.msra.mxu0 %v1408
        %1477 = vmatprep.subr.mxu0 0.0
        %1478 = vmatpush1.msra.mxu0 %v1407
        %1479 = vmatprep.subr.mxu0 0.0
        %1480 = vmatpush1.msra.mxu0 %v1406
        %1481 = vmatprep.subr.mxu0 0.0
        %1482 = vmatpush1.msra.mxu0 %v1405
        %1483 = vmatprep.subr.mxu0 0.0
        %1484 = vmatpush1.msra.mxu0 %v1404
        %1485 = vmatprep.subr.mxu0 0.0
        %1486 = vmatpush1.msra.mxu0 %v1403
        %1487 = vmatprep.subr.mxu0 0.0
        %1488 = vmatpush1.msra.mxu0 %v1402
        %1489 = vmatprep.subr.mxu0 0.0
        %1490 = vmatpush1.msra.mxu0 %v1401
        %1491 = vmatprep.subr.mxu0 0.0
        %1492 = vmatpush1.msra.mxu0 %v1400
        %1493 = vmatprep.subr.mxu0 0.0
        %1494 = vmatpush1.msra.mxu0 %v1399
        %1495 = vmatprep.subr.mxu0 0.0
        %1496 = vmatpush2.msra.mxu0 %v1430
        %1497 = vmatprep.subr.mxu0 0.0
        %1498 = vmatpush2.msra.mxu0 %v1429
        %1499 = vmatprep.subr.mxu0 0.0
        %1500 = vmatpush2.msra.mxu0 %v1428
        %1501 = vmatprep.subr.mxu0 0.0
        %1502 = vmatpush2.msra.mxu0 %v1427
        %1503 = vmatprep.subr.mxu0 0.0
        %1504 = vmatpush2.msra.mxu0 %v1426
        %1505 = vmatprep.subr.mxu0 0.0
        %1506 = vmatpush2.msra.mxu0 %v1425
        %1507 = vmatprep.subr.mxu0 0.0
        %1508 = vmatpush2.msra.mxu0 %v1424
        %1509 = vmatprep.subr.mxu0 0.0
        %1510 = vmatpush2.msra.mxu0 %v1423
        %1511 = vmatprep.subr.mxu0 0.0
        %1512 = vmatpush2.msra.mxu0 %v1422
        %1513 = vmatprep.subr.mxu0 0.0
        %1514 = vmatpush2.msra.mxu0 %v1421
        %1515 = vmatprep.subr.mxu0 0.0
        %1516 = vmatpush2.msra.mxu0 %v1420
        %1517 = vmatprep.subr.mxu0 0.0
        %1518 = vmatpush2.msra.mxu0 %v1419
        %1519 = vmatprep.subr.mxu0 0.0
        %1520 = vmatpush2.msra.mxu0 %v1418
        %1521 = vmatprep.subr.mxu0 0.0
        %1522 = vmatpush2.msra.mxu0 %v1417
        %1523 = vmatprep.subr.mxu0 0.0
        %1524 = vmatpush2.msra.mxu0 %v1416
        %1525 = vmatprep.subr.mxu0 0.0
        %1526 = vmatpush2.msra.mxu0 %v1415
        %1527 = vmatprep.mubr.f32.mxu0 %v1396
        %1528 = vmatmul.mubr.f32.gmra.mxu0 %v1395
        %v1529 = vpop.f32.mrf.mxu0
        %v1530 = vadd.f32 0.0, %v1529
        %v1531 = vpop.f32.mrf.mxu0
        %1532 = vdwg.mxu0
        %1533 = vmatprep.subr.mxu0 0.0
        %1534 = vmatpush1.msra.mxu0 %v1446
        %1535 = vmatprep.subr.mxu0 0.0
        %1536 = vmatpush1.msra.mxu0 %v1445
        %1537 = vmatprep.subr.mxu0 0.0
        %1538 = vmatpush1.msra.mxu0 %v1444
        %1539 = vmatprep.subr.mxu0 0.0
        %1540 = vmatpush1.msra.mxu0 %v1443
        %1541 = vmatprep.subr.mxu0 0.0
        %1542 = vmatpush1.msra.mxu0 %v1442
        %1543 = vmatprep.subr.mxu0 0.0
        %1544 = vmatpush1.msra.mxu0 %v1441
        %1545 = vmatprep.subr.mxu0 0.0
        %1546 = vmatpush1.msra.mxu0 %v1440
        %1547 = vmatprep.subr.mxu0 0.0
        %1548 = vmatpush1.msra.mxu0 %v1439
        %1549 = vmatprep.subr.mxu0 0.0
        %1550 = vmatpush1.msra.mxu0 %v1438
        %1551 = vmatprep.subr.mxu0 0.0
        %1552 = vmatpush1.msra.mxu0 %v1437
        %1553 = vmatprep.subr.mxu0 0.0
        %1554 = vmatpush1.msra.mxu0 %v1436
        %1555 = vmatprep.subr.mxu0 0.0
        %1556 = vmatpush1.msra.mxu0 %v1435
        %1557 = vmatprep.subr.mxu0 0.0
        %1558 = vmatpush1.msra.mxu0 %v1434
        %1559 = vmatprep.subr.mxu0 0.0
        %1560 = vmatpush1.msra.mxu0 %v1433
        %1561 = vmatprep.subr.mxu0 0.0
        %1562 = vmatpush1.msra.mxu0 %v1432
        %1563 = vmatprep.subr.mxu0 0.0
        %1564 = vmatpush1.msra.mxu0 %v1431
        %1565 = vmatprep.subr.mxu0 0.0
        %1566 = vmatpush2.msra.mxu0 %v1462
        %1567 = vmatprep.subr.mxu0 0.0
        %1568 = vmatpush2.msra.mxu0 %v1461
        %1569 = vmatprep.subr.mxu0 0.0
        %1570 = vmatpush2.msra.mxu0 %v1460
        %1571 = vmatprep.subr.mxu0 0.0
        %1572 = vmatpush2.msra.mxu0 %v1459
        %1573 = vmatprep.subr.mxu0 0.0
        %1574 = vmatpush2.msra.mxu0 %v1458
        %1575 = vmatprep.subr.mxu0 0.0
        %1576 = vmatpush2.msra.mxu0 %v1457
        %1577 = vmatprep.subr.mxu0 0.0
        %1578 = vmatpush2.msra.mxu0 %v1456
        %1579 = vmatprep.subr.mxu0 0.0
        %1580 = vmatpush2.msra.mxu0 %v1455
        %1581 = vmatprep.subr.mxu0 0.0
        %1582 = vmatpush2.msra.mxu0 %v1454
        %1583 = vmatprep.subr.mxu0 0.0
        %1584 = vmatpush2.msra.mxu0 %v1453
        %1585 = vmatprep.subr.mxu0 0.0
        %1586 = vmatpush2.msra.mxu0 %v1452
        %1587 = vmatprep.subr.mxu0 0.0
        %1588 = vmatpush2.msra.mxu0 %v1451
        %1589 = vmatprep.subr.mxu0 0.0
        %1590 = vmatpush2.msra.mxu0 %v1450
        %1591 = vmatprep.subr.mxu0 0.0
        %1592 = vmatpush2.msra.mxu0 %v1449
        %1593 = vmatprep.subr.mxu0 0.0
        %1594 = vmatpush2.msra.mxu0 %v1448
        %1595 = vmatprep.subr.mxu0 0.0
        %1596 = vmatpush2.msra.mxu0 %v1447
        %1597 = vmatprep.mubr.f32.mxu0 %v1398
        %1598 = vmatmul.mubr.f32.gmra.mxu0 %v1397
        %v1599 = vpop.f32.mrf.mxu0
        %v1600 = vadd.f32 %v1530, %v1599
        %v1601 = vpop.f32.mrf.mxu0
        %1602 = vdwg.mxu0
        %v1603 = vld [vmem:[%s10] sm:$0xff]
        %v1605 = vsel %vm1115, %v1114, 0
        %1607 = vmatprep.subr.mxu0 0.0
        %1608 = vmatpush1.msra.mxu0 0.0
        %1609 = vmatprep.subr.mxu0 0.0
        %1610 = vmatpush1.msra.mxu0 0.0
        %1611 = vmatprep.subr.mxu0 0.0
        %1612 = vmatpush1.msra.mxu0 0.0
        %1613 = vmatprep.subr.mxu0 0.0
        %1614 = vmatpush1.msra.mxu0 0.0
        %1615 = vmatprep.subr.mxu0 0.0
        %1616 = vmatpush1.msra.mxu0 0.0
        %1617 = vmatprep.subr.mxu0 0.0
        %1618 = vmatpush1.msra.mxu0 0.0
        %1619 = vmatprep.subr.mxu0 0.0
        %1620 = vmatpush1.msra.mxu0 0.0
        %1621 = vmatprep.subr.mxu0 0.0
        %1622 = vmatpush1.msra.mxu0 0.0
        %1623 = vmatprep.subr.mxu0 0.0
        %1624 = vmatpush1.msra.mxu0 0.0
        %1625 = vmatprep.subr.mxu0 0.0
        %1626 = vmatpush1.msra.mxu0 0.0
        %1627 = vmatprep.subr.mxu0 0.0
        %1628 = vmatpush1.msra.mxu0 0.0
        %1629 = vmatprep.subr.mxu0 0.0
        %1630 = vmatpush1.msra.mxu0 0.0
        %1631 = vmatprep.subr.mxu0 0.0
        %1632 = vmatpush1.msra.mxu0 0.0
        %1633 = vmatprep.subr.mxu0 0.0
        %1634 = vmatpush1.msra.mxu0 0.0
        %1635 = vmatprep.subr.mxu0 0.0
        %1636 = vmatpush1.msra.mxu0 0.0
        %1637 = vmatprep.subr.mxu0 0.0
        %1638 = vmatpush1.msra.mxu0 %v1603
        %1639 = vmatprep.subr.mxu0 0.0
        %1640 = vmatpush2.msra.mxu0 0.0
        %1641 = vmatprep.subr.mxu0 0.0
        %1642 = vmatpush2.msra.mxu0 0.0
        %1643 = vmatprep.subr.mxu0 0.0
        %1644 = vmatpush2.msra.mxu0 0.0
        %1645 = vmatprep.subr.mxu0 0.0
        %1646 = vmatpush2.msra.mxu0 0.0
        %1647 = vmatprep.subr.mxu0 0.0
        %1648 = vmatpush2.msra.mxu0 0.0
        %1649 = vmatprep.subr.mxu0 0.0
        %1650 = vmatpush2.msra.mxu0 0.0
        %1651 = vmatprep.subr.mxu0 0.0
        %1652 = vmatpush2.msra.mxu0 0.0
        %1653 = vmatprep.subr.mxu0 0.0
        %1654 = vmatpush2.msra.mxu0 0.0
        %1655 = vmatprep.subr.mxu0 0.0
        %1656 = vmatpush2.msra.mxu0 0.0
        %1657 = vmatprep.subr.mxu0 0.0
        %1658 = vmatpush2.msra.mxu0 0.0
        %1659 = vmatprep.subr.mxu0 0.0
        %1660 = vmatpush2.msra.mxu0 0.0
        %1661 = vmatprep.subr.mxu0 0.0
        %1662 = vmatpush2.msra.mxu0 0.0
        %1663 = vmatprep.subr.mxu0 0.0
        %1664 = vmatpush2.msra.mxu0 0.0
        %1665 = vmatprep.subr.mxu0 0.0
        %1666 = vmatpush2.msra.mxu0 0.0
        %1667 = vmatprep.subr.mxu0 0.0
        %1668 = vmatpush2.msra.mxu0 0.0
        %1669 = vmatprep.subr.mxu0 0.0
        %1670 = vmatpush2.msra.mxu0 0.0
        %1671 = vmatprep.mubr.f32.mxu0 0.0
        %1672 = vmatmul.mubr.f32.gmra.mxu0 %v1605
        %v1673 = vpop.f32.mrf.mxu0
        %v1674 = vadd.f32 0.0, %v1673
        %v1675 = vpop.f32.mrf.mxu0
        %1676 = vdwg.mxu0
        %v1677 = vmul.f32 %v1674, %v1600
        %v1678 = vsub.f32 1.0, %v1674
        %v1680 = vlaneseq
        %v1681 = vshrl.u32 %v1680, 7
        %v1682 = vsub.s32 0, %v1681
        %v1683 = vrot.slane %v720, %v1682
        %v1685 = vmul.f32 %v1678, %v1683
        %v1686 = vadd.f32 %v1677, %v1685
        %vm1687 = vcmask 261120
        %1688 = vst.msk [vmem:[%s686] sm:$0xff] %vm1687, %v1686
        %s1689 = sand.u32 %s364, 1
        %s1690 = scalar_lea.sflag [#allocation4], %s1689
        %s1691 = sand.u32 %s364, 1
        %s1692 = smul.addr %s1691, 8
        %s1693 = scalar_lea.vmem [#allocation11], %s1692
        %s1694 = sand.u32 %s390, 1
        %s1695 = scalar_lea.sflag [#allocation13], %s1694
        %s1696 = sand.u32 %s390, 1
        %s1697 = smul.addr %s1696, 8
        %s1698 = scalar_lea.vmem [#allocation12], %s1697
        %p1699 = scmp.lt.s32.totalorder %s42, 1
        %s1700 = scalar_select %p1699, %s42, 1
        %s1701 = smul.addr %s1700, 8
        %s1702 = scalar_lea.vmem %s16, %s1701
        %p1703 = scmp.lt.s32.totalorder %s42, 1
        %s1704 = scalar_select %p1703, %s42, 1
        %s1705 = smul.addr %s1704, 8
        %s1706 = scalar_lea.vmem %s17, %s1705
        // Predicated region
        $region97: #{tpu_custom_call.1} parent=75 // pred_check
          %p1707 = pneg %p374
        $region98: #{tpu_custom_call.1} parent=75 // pred_check_branch
          %1709 = sbr.rel (%p1707) target = $region100
        $region99: #{tpu_custom_call.1} parent=75 // pred_region
          %s1711 = ssub.s32 128, 128
          %1712 = vsyncadd %s1690, %s1711
          %s1713 = smul.addr %s42, 128
          %s1714 = scalar_lea.hbm %s14, %s1713
          %s1716 = sshll.u32 %s1693, 4
          %s1717 = int_to_ptr.vmem [resolvable:$true] %s1716
          %1719 = dma.vmem_to_hbm [thread:$0]  %s1717, 128, %s1714, %s1690
        $region100: #{tpu_custom_call.1} parent=75 // pred_fallthru
          _
        // Predicated region
        $region101: #{tpu_custom_call.1} parent=75 // pred_check
          %p1720 = pneg %p400
        $region102: #{tpu_custom_call.1} parent=75 // pred_check_branch
          %1722 = sbr.rel (%p1720) target = $region104
        $region103: #{tpu_custom_call.1} parent=75 // pred_region
          %s1724 = ssub.s32 128, 128
          %1725 = vsyncadd %s1695, %s1724
          %s1726 = smul.addr %s42, 128
          %s1727 = scalar_lea.hbm %s15, %s1726
          %s1729 = sshll.u32 %s1698, 4
          %s1730 = int_to_ptr.vmem [resolvable:$true] %s1729
          %1732 = dma.vmem_to_hbm [thread:$0]  %s1730, 128, %s1727, %s1695
        $region104: #{tpu_custom_call.1} parent=75 // pred_fallthru
          _
        // Predicated region
        $region105: #{tpu_custom_call.1} parent=75 // pred_check
          %p1733 = pneg %p426
        $region106: #{tpu_custom_call.1} parent=75 // pred_check_branch
          %1735 = sbr.rel (%p1733) target = $region108
        $region107: #{tpu_custom_call.1} parent=75 // pred_region
          _
        $region108: #{tpu_custom_call.1} parent=75 // pred_fallthru
          _
        // Predicated region
        $region109: #{tpu_custom_call.1} parent=75 // pred_check
          %p1736 = pneg %p452
        $region110: #{tpu_custom_call.1} parent=75 // pred_check_branch
          %1738 = sbr.rel (%p1736) target = $region112
        $region111: #{tpu_custom_call.1} parent=75 // pred_region
          _
        $region112: #{tpu_custom_call.1} parent=75 // pred_fallthru
          _
      $region76: #{tpu_custom_call.1} parent=5 // pred_fallthru
        _
      %p1739 = scmp.le.s32.totalorder 2, %s37
      // Predicated region
      $region113: #{tpu_custom_call.1} parent=5 // pred_check
        %p1740 = pneg %p1739
      $region114: #{tpu_custom_call.1} parent=5 // pred_check_branch
        %1742 = sbr.rel (%p1740) target = $region116
      $region115: #{tpu_custom_call.1} parent=5 // pred_region
        %s1743 = ssub.s32 %s37, 2
        // Predicated region
        $region117: #{tpu_custom_call.1} parent=115 // pred_check
          %p1744 = pneg %p380
        $region118: #{tpu_custom_call.1} parent=115 // pred_check_branch
          %1746 = sbr.rel (%p1744) target = $region120
        $region119: #{tpu_custom_call.1} parent=115 // pred_region
          %s1747 = sand.u32 %s365, 1
          %s1748 = scalar_lea.sflag [#allocation4], %s1747
          %s1749 = sand.u32 %s365, 1
          %s1750 = smul.addr %s1749, 8
          %s1751 = scalar_lea.vmem [#allocation11], %s1750
          %1752 = dma.done %s1748, 128
        $region120: #{tpu_custom_call.1} parent=115 // pred_fallthru
          _
        // Predicated region
        $region121: #{tpu_custom_call.1} parent=115 // pred_check
          %p1753 = pneg %p406
        $region122: #{tpu_custom_call.1} parent=115 // pred_check_branch
          %1755 = sbr.rel (%p1753) target = $region124
        $region123: #{tpu_custom_call.1} parent=115 // pred_region
          %s1756 = sand.u32 %s391, 1
          %s1757 = scalar_lea.sflag [#allocation13], %s1756
          %s1758 = sand.u32 %s391, 1
          %s1759 = smul.addr %s1758, 8
          %s1760 = scalar_lea.vmem [#allocation12], %s1759
          %1761 = dma.done %s1757, 128
        $region124: #{tpu_custom_call.1} parent=115 // pred_fallthru
          _
        // Predicated region
        $region125: #{tpu_custom_call.1} parent=115 // pred_check
          %p1762 = pneg %p432
        $region126: #{tpu_custom_call.1} parent=115 // pred_check_branch
          %1764 = sbr.rel (%p1762) target = $region128
        $region127: #{tpu_custom_call.1} parent=115 // pred_region
          %p1765 = scmp.lt.s32.totalorder %s43, 1
          %s1766 = scalar_select %p1765, %s43, 1
          %s1767 = smul.addr %s1766, 8
          %s1768 = scalar_lea.vmem %s16, %s1767
        $region128: #{tpu_custom_call.1} parent=115 // pred_fallthru
          _
        // Predicated region
        $region129: #{tpu_custom_call.1} parent=115 // pred_check
          %p1769 = pneg %p458
        $region130: #{tpu_custom_call.1} parent=115 // pred_check_branch
          %1771 = sbr.rel (%p1769) target = $region132
        $region131: #{tpu_custom_call.1} parent=115 // pred_region
          %p1772 = scmp.lt.s32.totalorder %s43, 1
          %s1773 = scalar_select %p1772, %s43, 1
          %s1774 = smul.addr %s1773, 8
          %s1775 = scalar_lea.vmem %s17, %s1774
        $region132: #{tpu_custom_call.1} parent=115 // pred_fallthru
          _
      $region116: #{tpu_custom_call.1} parent=5 // pred_fallthru
        _
    $region6: #{tpu_custom_call.1} parent=1 // loop_footer
      %s41 = sadd.s32 1, %s37
    $region7: #{tpu_custom_call.1} parent=1 // loop_footer_branch
      %36 = sbr.rel target = $region3
    $region8: #{tpu_custom_call.1} parent=1 // loop_exit
      _
    %1776 = vsyncpa [#allocation3], 1
    %s1777 = scalar_lea.sflag [#allocation3], 1
    %1778 = vsyncpa %s1777, 1
    %1779 = vsyncpa [#allocation6], 1
    %s1780 = scalar_lea.sflag [#allocation6], 1
    %1781 = vsyncpa %s1780, 1
    %1782 = vsyncpa [#allocation9], 1
    %1783 = vsyncpa [#allocation4], 1
    %s1784 = scalar_lea.sflag [#allocation4], 1
    %1785 = vsyncpa %s1784, 1
    %1786 = vsyncpa [#allocation13], 1
    %s1787 = scalar_lea.sflag [#allocation13], 1
    %1788 = vsyncpa %s1787, 1

</llo_original>
